<compile_context>
chip_gen: v5e
topology: v5e:2x2
jax: 0.10.0
libtpu: 0.0.40
codegen_flags: <defaults>
</compile_context>

<pallas_src>
import jax
import jax.numpy as jnp
from jax.experimental import pallas as pl
from jax.experimental.pallas import tpu as pltpu

LRELU = 0.2      # negative slope of the LeakyReLU in the reference module
IN_EPS = 1e-5    # nn.InstanceNorm2d default eps (affine=False, biased variance)


# --------------------------------------------------------------------------
# Fused Encoder kernel.
# --------------------------------------------------------------------------
def _make_encoder_kernel(downsample, n_blocks, nb, H, W, Cin, C, Ho, Wo):
    WC = Wo * C          # lane-packed activation width
    M = nb * Ho          # activation rows handled per grid step
    inv_hw = 1.0 / float(Ho * Wo)

    def kernel(*refs):
        idx = 0
        x_ref = refs[idx]; idx += 1
        if downsample:
            wd_ref = refs[idx]; bd_ref = refs[idx + 1]; idx += 2
        s_ref = refs[idx]; idx += 1
        blk_refs = refs[idx: idx + 2 * n_blocks]; idx += 2 * n_blocks
        o_ref = refs[idx]

        # ------------------------------------------------------------------
        # Stage 0: (optional) 2x2 max-pool + 1x1 conv, on lane-packed data.
        # Input block is (nb, H, W*Cin), lane-dense.
        # ------------------------------------------------------------------
        if downsample:
            L = W * Cin
            xin = x_ref[...]                                    # (nb, H, L)
            x2 = xin.reshape(M, 2 * L)                          # row pairs on lanes
            hmax = jnp.maximum(x2[:, :L], x2[:, L:])            # (M, L)  H-pool
            hm = hmax.reshape(M, Wo, 2 * Cin)                   # W pairs on lanes
            pooled = jnp.maximum(hm[..., :Cin], hm[..., Cin:])  # (M, Wo, Cin) W-pool
            pk = pooled.reshape(M, Wo * Cin)                    # lane-packed
            # 1x1 conv: block-diagonal kron(eye(Wo), W1) weight -> result is
            # already in the lane-packed (x*C + c) activation layout.
            act = jnp.dot(pk, wd_ref[...], preferred_element_type=jnp.float32)
            act = act + bd_ref[...]
        else:
            act = x_ref[...].reshape(M, WC).astype(jnp.float32)

        # Row index *within an image* (only needed when several images share M).
        if nb > 1:
            row = jax.lax.broadcasted_iota(jnp.int32, (M, WC), 0) % Ho

        zrow = jnp.zeros((1, WC), jnp.float32)

        # ------------------------------------------------------------------
        # BasicBlocks: conv3x3(+bias) -> InstanceNorm2d -> LeakyReLU(0.2).
        # ------------------------------------------------------------------
        for b in range(n_blocks):
            wb_ref = blk_refs[2 * b]        # (3, WC, WC) banded weights per ky
            bias_ref = blk_refs[2 * b + 1]  # (1, WC) lane-packed bias

            # Row taps (dy = -1, 0, +1).  'same' zero padding in H comes from
            # the zero row; padding in W is built into the banded weights.
            up = jnp.concatenate([zrow, act[:-1, :]], axis=0)   # act[r-1]
            dn = jnp.concatenate([act[1:, :], zrow], axis=0)    # act[r+1]
            if nb > 1:
                up = jnp.where(row == 0, 0.0, up)               # top of each image
                dn = jnp.where(row == Ho - 1, 0.0, dn)          # bottom of each image

            acc = jnp.dot(up, wb_ref[0], preferred_element_type=jnp.float32)
            acc = acc + jnp.dot(act, wb_ref[1], preferred_element_type=jnp.float32)
            acc = acc + jnp.dot(dn, wb_ref[2], preferred_element_type=jnp.float32)
            acc = acc + bias_ref[...]

            # InstanceNorm2d (affine=False, biased var) per (image, channel).
            # Stays lane-packed: sublane row-sum, then a tiny matmul with S
            # both reduces over x and re-broadcasts per-channel stats to lanes.
            acc3 = acc.reshape(nb, Ho, WC)
            rowsum = jnp.sum(acc3, axis=1)                      # (nb, WC)
            mean_p = jnp.dot(rowsum, s_ref[...],
                             preferred_element_type=jnp.float32) * inv_hw
            d = acc3 - mean_p[:, None, :]
            sqsum = jnp.sum(d * d, axis=1)                      # (nb, WC)
            var_p = jnp.dot(sqsum, s_ref[...],
                            preferred_element_type=jnp.float32) * inv_hw
            y = d * jax.lax.rsqrt(var_p + IN_EPS)[:, None, :]
            act = jnp.where(y >= 0, y, LRELU * y).reshape(M, WC)

        # Lane-dense store: (nb, Ho, Wo*C) -> unmasked vst rows.
        o_ref[...] = act.reshape(nb, Ho, WC).astype(o_ref.dtype)

    return kernel


# --------------------------------------------------------------------------
# Wrapper: lane-dense relabels, weight packing, grid / VMEM-budget choice.
# --------------------------------------------------------------------------
def encoder_forward(params, x):
    """Fused Encoder forward.  x: (N, H, W, Cin) float32 NHWC; returns NHWC."""
    downsample = params["downsample"]
    N, H, W, Cin = x.shape
    blocks = params["blocks"]
    n_blocks = len(blocks)
    C = blocks[0]["w"].shape[-1]

    if downsample:
        assert H % 2 == 0 and W % 2 == 0, "MaxPool2d(2) needs even H, W"
        Ho, Wo = H // 2, W // 2
    else:
        assert Cin == C, "identity encoder requires in_channel == channels"
        Ho, Wo = H, W
    WC = Wo * C
    in_last = W * Cin if downsample else WC

    # ---- batch-per-step: fold batch into matmul M, but keep >= 2 grid steps
    #      when N >= 2 (v7x has two TensorCores) and stay within a VMEM budget.
    weight_bytes = 4 * (n_blocks * (3 * WC * WC + WC) + WC * WC
                        + ((Wo * Cin * WC + WC) if downsample else 0))

    def step_bytes(nb):
        act = 4 * nb * Ho * WC
        xin = 4 * nb * H * in_last
        # double-buffered I/O blocks + resident weights + live in-kernel temps
        return 2 * (xin + act) + 2 * weight_bytes + 8 * act

    VMEM_BUDGET = 24 << 20            # conservative: v7x has 64 MiB physical/TC
    min_steps = 2 if N >= 2 else 1
    nb = 1
    for d in range(N, 0, -1):
        if N % d == 0 and N // d >= min_steps and step_bytes(d) <= VMEM_BUDGET:
            nb = d
            break
    n_steps = N // nb
    vmem_limit = None
    if step_bytes(nb) > (12 << 20):   # above the v5e default scoped limit
        # TODO(synk): for very large images spatial tiling (+ cross-tile
        # InstanceNorm reduction) is the right fix, not just a bigger limit.
        vmem_limit = min(64 << 20, int(step_bytes(nb) * 3 // 2))

    # ---- pack weights into the lane-packed layouts the kernel consumes.
    # (Under jit these fold into per-shape constants; pre-pack once for
    #  repeated eager calls.)
    f32 = jnp.float32
    inputs, in_specs = [], []

    if downsample:
        inputs.append(x.reshape(N, H, W * Cin))                     # lane-dense
        in_specs.append(pl.BlockSpec((nb, H, W * Cin), lambda n: (n, 0, 0)))
        wd = jnp.kron(jnp.eye(Wo, dtype=f32), params["down_w"].astype(f32))
        bd = jnp.tile(params["down_b"].reshape(1, C).astype(f32), (1, Wo))
        inputs += [wd, bd]
        in_specs += [pl.BlockSpec((Wo * Cin, WC), lambda n: (0, 0)),
                     pl.BlockSpec((1, WC), lambda n: (0, 0))]
    else:
        inputs.append(x.reshape(N, Ho, WC))                         # lane-dense
        in_specs.append(pl.BlockSpec((nb, Ho, WC), lambda n: (n, 0, 0)))

    # InstanceNorm group-sum / broadcast matrix: S[x*C+ci, x2*C+co] = (ci == co).
    s_mat = jnp.kron(jnp.ones((Wo, Wo), f32), jnp.eye(C, dtype=f32))
    inputs.append(s_mat)
    in_specs.append(pl.BlockSpec((WC, WC), lambda n: (0, 0)))

    # Banded 3x3 weights: Wband[ky][xin*C+ci, xout*C+co] = w[ky, xin-xout+1, ci, co]
    # for |xin-xout| <= 1, else 0 (W-direction 'same' padding is implicit).
    eye_k = [jnp.eye(Wo, k=1 - kx, dtype=f32) for kx in range(3)]
    for blk in blocks:
        w3 = blk["w"].astype(f32)                                   # (3,3,Cin,Cout) HWIO
        wband = jnp.stack(
            [sum(jnp.kron(eye_k[kx], w3[ky, kx]) for kx in range(3))
             for ky in range(3)], axis=0)                           # (3, WC, WC)
        bias = jnp.tile(blk["b"].reshape(1, C).astype(f32), (1, Wo))
        inputs += [wband, bias]
        in_specs += [pl.BlockSpec((3, WC, WC), lambda n: (0, 0, 0)),
                     pl.BlockSpec((1, WC), lambda n: (0, 0))]

    kernel = _make_encoder_kernel(downsample, n_blocks, nb, H, W, Cin, C, Ho, Wo)
    out = pl.pallas_call(
        kernel,
        out_shape=jax.ShapeDtypeStruct((N, Ho, WC), jnp.float32),   # lane-dense
        grid=(n_steps,),
        in_specs=in_specs,
        out_specs=pl.BlockSpec((nb, Ho, WC), lambda n: (n, 0, 0)),
        compiler_params=pltpu.CompilerParams(
            dimension_semantics=("parallel",),       # v7x: shard steps over 2 TCs
            vmem_limit_bytes=vmem_limit),
    )(*inputs)
    return out.reshape(N, Ho, Wo, C)                                # free relabel


# --------------------------------------------------------------------------
# Deterministic synthetic parameters matching the module's shapes.
#   conv1x1 weight: (Cin, Cout);  conv3x3 weight: (3, 3, Cin, Cout) HWIO;
#   biases: (C,).  (PyTorch import: OIHW -> permute(2,3,1,0).)
# --------------------------------------------------------------------------
def init_encoder_params(key, in_channel, channels, depth=1):
    downsample = in_channel != channels
    params = {"downsample": downsample}
    n_blocks = 2 * depth
    keys = iter(jax.random.split(key, 2 + 2 * n_blocks))

    def rnd(shape, scale):
        return jax.random.normal(next(keys), shape, jnp.float32) * scale

    if downsample:
        params["down_w"] = rnd((in_channel, channels), 0.2)
        params["down_b"] = rnd((channels,), 0.1)
    params["blocks"] = [
        {"w": rnd((3, 3, channels, channels), 0.1),
         "b": rnd((channels,), 0.1)}
        for _ in range(n_blocks)]
    return params


# --------------------------------------------------------------------------
# Pure-JAX reference (NHWC) for numerical validation of the fused kernel.
# --------------------------------------------------------------------------
def encoder_reference(params, x):
    if params["downsample"]:
        N, H, W, Cin = x.shape
        x = x.reshape(N, H // 2, 2, W // 2, 2, Cin).max(axis=(2, 4))
        x = jnp.einsum("nhwc,cd->nhwd", x, params["down_w"],
                       precision="highest") + params["down_b"]
    for blk in params["blocks"]:
        y = jax.lax.conv_general_dilated(
            x, blk["w"], window_strides=(1, 1), padding="SAME",
            dimension_numbers=("NHWC", "HWIO", "NHWC"),
            precision=jax.lax.Precision.HIGHEST)
        y = y + blk["b"]
        mean = y.mean(axis=(1, 2), keepdims=True)
        var = jnp.square(y - mean).mean(axis=(1, 2), keepdims=True)
        y = (y - mean) * jax.lax.rsqrt(var + IN_EPS)
        x = jnp.where(y >= 0, y, LRELU * y)
    return x


# --------------------------------------------------------------------------
if __name__ == "__main__":
    key = jax.random.PRNGKey(0)
    kp1, kp2, kx1, kx2 = jax.random.split(key, 4)

    # Case 1: downsampling encoder — Encoder(in_channel=8, channels=16, depth=1)
    B, H, W, CIN, CH = 2, 16, 16, 8, 16
    p1 = init_encoder_params(kp1, CIN, CH, depth=1)
    x1 = jax.random.normal(kx1, (B, H, W, CIN), jnp.float32)
    out1 = encoder_forward(p1, x1)
    ref1 = encoder_reference(p1, x1)
    jax.block_until_ready((out1, ref1))
    assert out1.shape == (B, H // 2, W // 2, CH) and out1.dtype == jnp.float32
    assert bool(jnp.all(jnp.isfinite(out1)))
    err1 = float(jnp.max(jnp.abs(out1 - ref1)))
    assert err1 < 2e-3, f"mismatch vs reference (downsample case): {err1}"

    # Case 2: identity-channel encoder — Encoder(in_channel=16, channels=16)
    p2 = init_encoder_params(kp2, CH, CH, depth=1)
    x2 = jax.random.normal(kx2, (B, H // 2, W // 2, CH), jnp.float32)
    out2 = encoder_forward(p2, x2)
    ref2 = encoder_reference(p2, x2)
    jax.block_until_ready((out2, ref2))
    assert out2.shape == (B, H // 2, W // 2, CH)
    err2 = float(jnp.max(jnp.abs(out2 - ref2)))
    assert err2 < 2e-3, f"mismatch vs reference (identity case): {err2}"

    print("KERNEL_OK")
</pallas_src>

<mosaic_0001>
module attributes {stable_mosaic.version = 11 : i64} {
  func.func @kernel(%arg0: i32, %arg1: memref<1x16x128xf32, #tpu.memory_space<vmem>>, %arg2: memref<64x128xf32, #tpu.memory_space<vmem>>, %arg3: memref<1x128xf32, #tpu.memory_space<vmem>>, %arg4: memref<128x128xf32, #tpu.memory_space<vmem>>, %arg5: memref<3x128x128xf32, #tpu.memory_space<vmem>>, %arg6: memref<1x128xf32, #tpu.memory_space<vmem>>, %arg7: memref<3x128x128xf32, #tpu.memory_space<vmem>>, %arg8: memref<1x128xf32, #tpu.memory_space<vmem>>, %arg9: memref<1x8x128xf32, #tpu.memory_space<vmem>>) attributes {dimension_semantics = [#tpu.dimension_semantics<parallel>], iteration_bounds = array<i64: 2>, scalar_prefetch = 0 : i64, scratch_operands = 0 : i64, tpu.core_type = #tpu.core_type<tc>, window_params = [{transform_indices = @transform_0, window_bounds = array<i64: 1, 16, 128>}, {pipeline_mode = #tpu.pipeline_mode<synchronous>, transform_indices = @transform_1, window_bounds = array<i64: 64, 128>}, {pipeline_mode = #tpu.pipeline_mode<synchronous>, transform_indices = @transform_2, window_bounds = array<i64: 1, 128>}, {pipeline_mode = #tpu.pipeline_mode<synchronous>, transform_indices = @transform_3, window_bounds = array<i64: 128, 128>}, {pipeline_mode = #tpu.pipeline_mode<synchronous>, transform_indices = @transform_4, window_bounds = array<i64: 3, 128, 128>}, {pipeline_mode = #tpu.pipeline_mode<synchronous>, transform_indices = @transform_5, window_bounds = array<i64: 1, 128>}, {pipeline_mode = #tpu.pipeline_mode<synchronous>, transform_indices = @transform_6, window_bounds = array<i64: 3, 128, 128>}, {pipeline_mode = #tpu.pipeline_mode<synchronous>, transform_indices = @transform_7, window_bounds = array<i64: 1, 128>}, {transform_indices = @transform_8, window_bounds = array<i64: 1, 8, 128>}]} {
    %c0 = arith.constant 0 : index
    %c0_0 = arith.constant 0 : index
    %c0_1 = arith.constant 0 : index
    %0 = vector.load %arg1[%c0, %c0_0, %c0_1] : memref<1x16x128xf32, #tpu.memory_space<vmem>>, vector<1x16x128xf32>
    %1 = vector.shape_cast %0 : vector<1x16x128xf32> to vector<8x256xf32>
    %2 = vector.extract_strided_slice %1 {offsets = [0, 0], sizes = [8, 128], strides = [1, 1]} : vector<8x256xf32> to vector<8x128xf32>
    %3 = vector.extract_strided_slice %1 {offsets = [0, 128], sizes = [8, 128], strides = [1, 1]} : vector<8x256xf32> to vector<8x128xf32>
    %4 = arith.maximumf %2, %3 : vector<8x128xf32>
    %5 = vector.shape_cast %4 : vector<8x128xf32> to vector<8x8x16xf32>
    %6 = vector.extract_strided_slice %5 {offsets = [0, 0, 0], sizes = [8, 8, 8], strides = [1, 1, 1]} : vector<8x8x16xf32> to vector<8x8x8xf32>
    %7 = vector.extract_strided_slice %5 {offsets = [0, 0, 8], sizes = [8, 8, 8], strides = [1, 1, 1]} : vector<8x8x16xf32> to vector<8x8x8xf32>
    %8 = arith.maximumf %6, %7 : vector<8x8x8xf32>
    %9 = vector.shape_cast %8 : vector<8x8x8xf32> to vector<8x64xf32>
    %c0_2 = arith.constant 0 : index
    %c0_3 = arith.constant 0 : index
    %10 = vector.load %arg2[%c0_2, %c0_3] : memref<64x128xf32, #tpu.memory_space<vmem>>, vector<64x128xf32>
    %cst = arith.constant dense<0.000000e+00> : vector<8x128xf32>
    %11 = tpu.matmul %9, %10, %cst {dimension_numbers = #tpu.dot_dimension_numbers<[1], [0], [0], [1], [0, 0, 1, 1], [], []>} : vector<8x64xf32>, vector<64x128xf32>, vector<8x128xf32> -> vector<8x128xf32>
    %c0_4 = arith.constant 0 : index
    %c0_5 = arith.constant 0 : index
    %12 = vector.load %arg3[%c0_4, %c0_5] : memref<1x128xf32, #tpu.memory_space<vmem>>, vector<1x128xf32>
    %13 = vector.broadcast %12 : vector<1x128xf32> to vector<8x128xf32>
    %14 = arith.addf %11, %13 : vector<8x128xf32>
    %cst_6 = arith.constant 0.000000e+00 : f32
    %15 = vector.broadcast %cst_6 : f32 to vector<1x128xf32>
    %16 = vector.extract_strided_slice %14 {offsets = [0, 0], sizes = [7, 128], strides = [1, 1]} : vector<8x128xf32> to vector<7x128xf32>
    %17 = tpu.concatenate %15, %16 in 0 : vector<1x128xf32>, vector<7x128xf32> -> vector<8x128xf32>
    %18 = vector.extract_strided_slice %14 {offsets = [1, 0], sizes = [7, 128], strides = [1, 1]} : vector<8x128xf32> to vector<7x128xf32>
    %19 = tpu.concatenate %18, %15 in 0 : vector<7x128xf32>, vector<1x128xf32> -> vector<8x128xf32>
    %c0_7 = arith.constant 0 : index
    %c0_8 = arith.constant 0 : index
    %c0_9 = arith.constant 0 : index
    %20 = vector.load %arg5[%c0_7, %c0_8, %c0_9] : memref<3x128x128xf32, #tpu.memory_space<vmem>>, vector<1x128x128xf32>
    %21 = vector.shape_cast %20 : vector<1x128x128xf32> to vector<128x128xf32>
    %cst_10 = arith.constant dense<0.000000e+00> : vector<8x128xf32>
    %22 = tpu.matmul %17, %21, %cst_10 {dimension_numbers = #tpu.dot_dimension_numbers<[1], [0], [0], [1], [0, 0, 1, 1], [], []>} : vector<8x128xf32>, vector<128x128xf32>, vector<8x128xf32> -> vector<8x128xf32>
    %c1 = arith.constant 1 : index
    %c0_11 = arith.constant 0 : index
    %c0_12 = arith.constant 0 : index
    %23 = vector.load %arg5[%c1, %c0_11, %c0_12] : memref<3x128x128xf32, #tpu.memory_space<vmem>>, vector<1x128x128xf32>
    %24 = vector.shape_cast %23 : vector<1x128x128xf32> to vector<128x128xf32>
    %cst_13 = arith.constant dense<0.000000e+00> : vector<8x128xf32>
    %25 = tpu.matmul %14, %24, %cst_13 {dimension_numbers = #tpu.dot_dimension_numbers<[1], [0], [0], [1], [0, 0, 1, 1], [], []>} : vector<8x128xf32>, vector<128x128xf32>, vector<8x128xf32> -> vector<8x128xf32>
    %26 = arith.addf %22, %25 : vector<8x128xf32>
    %c2 = arith.constant 2 : index
    %c0_14 = arith.constant 0 : index
    %c0_15 = arith.constant 0 : index
    %27 = vector.load %arg5[%c2, %c0_14, %c0_15] : memref<3x128x128xf32, #tpu.memory_space<vmem>>, vector<1x128x128xf32>
    %28 = vector.shape_cast %27 : vector<1x128x128xf32> to vector<128x128xf32>
    %cst_16 = arith.constant dense<0.000000e+00> : vector<8x128xf32>
    %29 = tpu.matmul %19, %28, %cst_16 {dimension_numbers = #tpu.dot_dimension_numbers<[1], [0], [0], [1], [0, 0, 1, 1], [], []>} : vector<8x128xf32>, vector<128x128xf32>, vector<8x128xf32> -> vector<8x128xf32>
    %30 = arith.addf %26, %29 : vector<8x128xf32>
    %c0_17 = arith.constant 0 : index
    %c0_18 = arith.constant 0 : index
    %31 = vector.load %arg6[%c0_17, %c0_18] : memref<1x128xf32, #tpu.memory_space<vmem>>, vector<1x128xf32>
    %32 = vector.broadcast %31 : vector<1x128xf32> to vector<8x128xf32>
    %33 = arith.addf %30, %32 : vector<8x128xf32>
    %34 = vector.shape_cast %33 : vector<8x128xf32> to vector<1x8x128xf32>
    %cst_19 = arith.constant dense<0.000000e+00> : vector<1x128xf32>
    %35 = vector.multi_reduction <add>, %34, %cst_19 [1] : vector<1x8x128xf32> to vector<1x128xf32>
    %c0_20 = arith.constant 0 : index
    %c0_21 = arith.constant 0 : index
    %36 = vector.load %arg4[%c0_20, %c0_21] : memref<128x128xf32, #tpu.memory_space<vmem>>, vector<128x128xf32>
    %cst_22 = arith.constant dense<0.000000e+00> : vector<1x128xf32>
    %37 = tpu.matmul %35, %36, %cst_22 {dimension_numbers = #tpu.dot_dimension_numbers<[1], [0], [0], [1], [0, 0, 1, 1], [], []>} : vector<1x128xf32>, vector<128x128xf32>, vector<1x128xf32> -> vector<1x128xf32>
    %cst_23 = arith.constant 1.562500e-02 : f32
    %38 = vector.broadcast %cst_23 : f32 to vector<1x128xf32>
    %39 = arith.mulf %37, %38 : vector<1x128xf32>
    %40 = vector.shape_cast %39 : vector<1x128xf32> to vector<1x1x128xf32>
    %41 = vector.broadcast %40 : vector<1x1x128xf32> to vector<1x8x128xf32>
    %42 = arith.subf %34, %41 : vector<1x8x128xf32>
    %43 = arith.mulf %42, %42 : vector<1x8x128xf32>
    %cst_24 = arith.constant dense<0.000000e+00> : vector<1x128xf32>
    %44 = vector.multi_reduction <add>, %43, %cst_24 [1] : vector<1x8x128xf32> to vector<1x128xf32>
    %c0_25 = arith.constant 0 : index
    %c0_26 = arith.constant 0 : index
    %45 = vector.load %arg4[%c0_25, %c0_26] : memref<128x128xf32, #tpu.memory_space<vmem>>, vector<128x128xf32>
    %cst_27 = arith.constant dense<0.000000e+00> : vector<1x128xf32>
    %46 = tpu.matmul %44, %45, %cst_27 {dimension_numbers = #tpu.dot_dimension_numbers<[1], [0], [0], [1], [0, 0, 1, 1], [], []>} : vector<1x128xf32>, vector<128x128xf32>, vector<1x128xf32> -> vector<1x128xf32>
    %cst_28 = arith.constant 1.562500e-02 : f32
    %47 = vector.broadcast %cst_28 : f32 to vector<1x128xf32>
    %48 = arith.mulf %46, %47 : vector<1x128xf32>
    %cst_29 = arith.constant 9.99999974E-6 : f32
    %49 = vector.broadcast %cst_29 : f32 to vector<1x128xf32>
    %50 = arith.addf %48, %49 : vector<1x128xf32>
    %51 = math.rsqrt %50 : vector<1x128xf32>
    %52 = vector.shape_cast %51 : vector<1x128xf32> to vector<1x1x128xf32>
    %53 = vector.broadcast %52 : vector<1x1x128xf32> to vector<1x8x128xf32>
    %54 = arith.mulf %42, %53 : vector<1x8x128xf32>
    %cst_30 = arith.constant 0.000000e+00 : f32
    %55 = vector.broadcast %cst_30 : f32 to vector<1x8x128xf32>
    %56 = arith.cmpf oge, %54, %55 : vector<1x8x128xf32>
    %cst_31 = arith.constant 2.000000e-01 : f32
    %57 = vector.broadcast %cst_31 : f32 to vector<1x8x128xf32>
    %58 = arith.mulf %57, %54 : vector<1x8x128xf32>
    %59 = arith.select %56, %54, %58 : vector<1x8x128xi1>, vector<1x8x128xf32>
    %60 = vector.shape_cast %59 : vector<1x8x128xf32> to vector<8x128xf32>
    %61 = vector.extract_strided_slice %60 {offsets = [0, 0], sizes = [7, 128], strides = [1, 1]} : vector<8x128xf32> to vector<7x128xf32>
    %62 = tpu.concatenate %15, %61 in 0 : vector<1x128xf32>, vector<7x128xf32> -> vector<8x128xf32>
    %63 = vector.extract_strided_slice %60 {offsets = [1, 0], sizes = [7, 128], strides = [1, 1]} : vector<8x128xf32> to vector<7x128xf32>
    %64 = tpu.concatenate %63, %15 in 0 : vector<7x128xf32>, vector<1x128xf32> -> vector<8x128xf32>
    %c0_32 = arith.constant 0 : index
    %c0_33 = arith.constant 0 : index
    %c0_34 = arith.constant 0 : index
    %65 = vector.load %arg7[%c0_32, %c0_33, %c0_34] : memref<3x128x128xf32, #tpu.memory_space<vmem>>, vector<1x128x128xf32>
    %66 = vector.shape_cast %65 : vector<1x128x128xf32> to vector<128x128xf32>
    %cst_35 = arith.constant dense<0.000000e+00> : vector<8x128xf32>
    %67 = tpu.matmul %62, %66, %cst_35 {dimension_numbers = #tpu.dot_dimension_numbers<[1], [0], [0], [1], [0, 0, 1, 1], [], []>} : vector<8x128xf32>, vector<128x128xf32>, vector<8x128xf32> -> vector<8x128xf32>
    %c1_36 = arith.constant 1 : index
    %c0_37 = arith.constant 0 : index
    %c0_38 = arith.constant 0 : index
    %68 = vector.load %arg7[%c1_36, %c0_37, %c0_38] : memref<3x128x128xf32, #tpu.memory_space<vmem>>, vector<1x128x128xf32>
    %69 = vector.shape_cast %68 : vector<1x128x128xf32> to vector<128x128xf32>
    %cst_39 = arith.constant dense<0.000000e+00> : vector<8x128xf32>
    %70 = tpu.matmul %60, %69, %cst_39 {dimension_numbers = #tpu.dot_dimension_numbers<[1], [0], [0], [1], [0, 0, 1, 1], [], []>} : vector<8x128xf32>, vector<128x128xf32>, vector<8x128xf32> -> vector<8x128xf32>
    %71 = arith.addf %67, %70 : vector<8x128xf32>
    %c2_40 = arith.constant 2 : index
    %c0_41 = arith.constant 0 : index
    %c0_42 = arith.constant 0 : index
    %72 = vector.load %arg7[%c2_40, %c0_41, %c0_42] : memref<3x128x128xf32, #tpu.memory_space<vmem>>, vector<1x128x128xf32>
    %73 = vector.shape_cast %72 : vector<1x128x128xf32> to vector<128x128xf32>
    %cst_43 = arith.constant dense<0.000000e+00> : vector<8x128xf32>
    %74 = tpu.matmul %64, %73, %cst_43 {dimension_numbers = #tpu.dot_dimension_numbers<[1], [0], [0], [1], [0, 0, 1, 1], [], []>} : vector<8x128xf32>, vector<128x128xf32>, vector<8x128xf32> -> vector<8x128xf32>
    %75 = arith.addf %71, %74 : vector<8x128xf32>
    %c0_44 = arith.constant 0 : index
    %c0_45 = arith.constant 0 : index
    %76 = vector.load %arg8[%c0_44, %c0_45] : memref<1x128xf32, #tpu.memory_space<vmem>>, vector<1x128xf32>
    %77 = vector.broadcast %76 : vector<1x128xf32> to vector<8x128xf32>
    %78 = arith.addf %75, %77 : vector<8x128xf32>
    %79 = vector.shape_cast %78 : vector<8x128xf32> to vector<1x8x128xf32>
    %cst_46 = arith.constant dense<0.000000e+00> : vector<1x128xf32>
    %80 = vector.multi_reduction <add>, %79, %cst_46 [1] : vector<1x8x128xf32> to vector<1x128xf32>
    %c0_47 = arith.constant 0 : index
    %c0_48 = arith.constant 0 : index
    %81 = vector.load %arg4[%c0_47, %c0_48] : memref<128x128xf32, #tpu.memory_space<vmem>>, vector<128x128xf32>
    %cst_49 = arith.constant dense<0.000000e+00> : vector<1x128xf32>
    %82 = tpu.matmul %80, %81, %cst_49 {dimension_numbers = #tpu.dot_dimension_numbers<[1], [0], [0], [1], [0, 0, 1, 1], [], []>} : vector<1x128xf32>, vector<128x128xf32>, vector<1x128xf32> -> vector<1x128xf32>
    %cst_50 = arith.constant 1.562500e-02 : f32
    %83 = vector.broadcast %cst_50 : f32 to vector<1x128xf32>
    %84 = arith.mulf %82, %83 : vector<1x128xf32>
    %85 = vector.shape_cast %84 : vector<1x128xf32> to vector<1x1x128xf32>
    %86 = vector.broadcast %85 : vector<1x1x128xf32> to vector<1x8x128xf32>
    %87 = arith.subf %79, %86 : vector<1x8x128xf32>
    %88 = arith.mulf %87, %87 : vector<1x8x128xf32>
    %cst_51 = arith.constant dense<0.000000e+00> : vector<1x128xf32>
    %89 = vector.multi_reduction <add>, %88, %cst_51 [1] : vector<1x8x128xf32> to vector<1x128xf32>
    %c0_52 = arith.constant 0 : index
    %c0_53 = arith.constant 0 : index
    %90 = vector.load %arg4[%c0_52, %c0_53] : memref<128x128xf32, #tpu.memory_space<vmem>>, vector<128x128xf32>
    %cst_54 = arith.constant dense<0.000000e+00> : vector<1x128xf32>
    %91 = tpu.matmul %89, %90, %cst_54 {dimension_numbers = #tpu.dot_dimension_numbers<[1], [0], [0], [1], [0, 0, 1, 1], [], []>} : vector<1x128xf32>, vector<128x128xf32>, vector<1x128xf32> -> vector<1x128xf32>
    %cst_55 = arith.constant 1.562500e-02 : f32
    %92 = vector.broadcast %cst_55 : f32 to vector<1x128xf32>
    %93 = arith.mulf %91, %92 : vector<1x128xf32>
    %cst_56 = arith.constant 9.99999974E-6 : f32
    %94 = vector.broadcast %cst_56 : f32 to vector<1x128xf32>
    %95 = arith.addf %93, %94 : vector<1x128xf32>
    %96 = math.rsqrt %95 : vector<1x128xf32>
    %97 = vector.shape_cast %96 : vector<1x128xf32> to vector<1x1x128xf32>
    %98 = vector.broadcast %97 : vector<1x1x128xf32> to vector<1x8x128xf32>
    %99 = arith.mulf %87, %98 : vector<1x8x128xf32>
    %cst_57 = arith.constant 0.000000e+00 : f32
    %100 = vector.broadcast %cst_57 : f32 to vector<1x8x128xf32>
    %101 = arith.cmpf oge, %99, %100 : vector<1x8x128xf32>
    %cst_58 = arith.constant 2.000000e-01 : f32
    %102 = vector.broadcast %cst_58 : f32 to vector<1x8x128xf32>
    %103 = arith.mulf %102, %99 : vector<1x8x128xf32>
    %104 = arith.select %101, %99, %103 : vector<1x8x128xi1>, vector<1x8x128xf32>
    %105 = vector.shape_cast %104 : vector<1x8x128xf32> to vector<8x128xf32>
    %106 = vector.shape_cast %105 : vector<8x128xf32> to vector<1x8x128xf32>
    %c0_59 = arith.constant 0 : index
    %c0_60 = arith.constant 0 : index
    %c0_61 = arith.constant 0 : index
    %107 = vector.load %arg9[%c0_59, %c0_60, %c0_61] : memref<1x8x128xf32, #tpu.memory_space<vmem>>, vector<1x8x128xf32>
    tpu.vector_store %arg9[%c0_59, %c0_60, %c0_61], %106 {strides = array<i32>} : memref<1x8x128xf32, #tpu.memory_space<vmem>>, vector<1x8x128xf32>,
    return
  }
  func.func @transform_0(%arg0: i32) -> (i32, i32, i32) {
    %c0_i32 = arith.constant 0 : i32
    %c0_i32_0 = arith.constant 0 : i32
    %c0_i32_1 = arith.constant 0 : i32
    return %arg0, %c0_i32, %c0_i32_0 : i32, i32, i32
  }
  func.func @transform_1(%arg0: i32) -> (i32, i32) {
    %c0_i32 = arith.constant 0 : i32
    %c0_i32_0 = arith.constant 0 : i32
    %c0_i32_1 = arith.constant 0 : i32
    return %c0_i32, %c0_i32_0 : i32, i32
  }
  func.func @transform_2(%arg0: i32) -> (i32, i32) {
    %c0_i32 = arith.constant 0 : i32
    %c0_i32_0 = arith.constant 0 : i32
    %c0_i32_1 = arith.constant 0 : i32
    return %c0_i32, %c0_i32_0 : i32, i32
  }
  func.func @transform_3(%arg0: i32) -> (i32, i32) {
    %c0_i32 = arith.constant 0 : i32
    %c0_i32_0 = arith.constant 0 : i32
    %c0_i32_1 = arith.constant 0 : i32
    return %c0_i32, %c0_i32_0 : i32, i32
  }
  func.func @transform_4(%arg0: i32) -> (i32, i32, i32) {
    %c0_i32 = arith.constant 0 : i32
    %c0_i32_0 = arith.constant 0 : i32
    %c0_i32_1 = arith.constant 0 : i32
    %c0_i32_2 = arith.constant 0 : i32
    return %c0_i32, %c0_i32_0, %c0_i32_1 : i32, i32, i32
  }
  func.func @transform_5(%arg0: i32) -> (i32, i32) {
    %c0_i32 = arith.constant 0 : i32
    %c0_i32_0 = arith.constant 0 : i32
    %c0_i32_1 = arith.constant 0 : i32
    return %c0_i32, %c0_i32_0 : i32, i32
  }
  func.func @transform_6(%arg0: i32) -> (i32, i32, i32) {
    %c0_i32 = arith.constant 0 : i32
    %c0_i32_0 = arith.constant 0 : i32
    %c0_i32_1 = arith.constant 0 : i32
    %c0_i32_2 = arith.constant 0 : i32
    return %c0_i32, %c0_i32_0, %c0_i32_1 : i32, i32, i32
  }
  func.func @transform_7(%arg0: i32) -> (i32, i32) {
    %c0_i32 = arith.constant 0 : i32
    %c0_i32_0 = arith.constant 0 : i32
    %c0_i32_1 = arith.constant 0 : i32
    return %c0_i32, %c0_i32_0 : i32, i32
  }
  func.func @transform_8(%arg0: i32) -> (i32, i32, i32) {
    %c0_i32 = arith.constant 0 : i32
    %c0_i32_0 = arith.constant 0 : i32
    %c0_i32_1 = arith.constant 0 : i32
    return %arg0, %c0_i32, %c0_i32_0 : i32, i32, i32
  }
}

</mosaic_0001>

<llo_original>
// kernel: tpu_custom_call.1
$region0: #{tpu_custom_call.1}
  #allocation0 [shape = 'u32[]', space=smem, size = 0x4, offset = 0x4, fixed_abs, tag = 'smem constant byte address 0x4 - core index']
  #allocation1 [shape = 'u32[72,128]{1,0:T(1,128)}', space=vmem, size = 0x9000, scoped, tag = 'internal scratch']
  %s0 = inlined_call_operand.hbm [shape: f32[2,16,128], index: 0, kind: input, shape index: {}]
  %s1 = inlined_call_operand.hbm [shape: f32[64,128], index: 1, kind: input, shape index: {}]
  %s2 = inlined_call_operand.vmem [shape: f32[1,128], index: 2, kind: input, shape index: {}]
  %s3 = inlined_call_operand.hbm [shape: f32[128,128], index: 3, kind: input, shape index: {}]
  %s4 = inlined_call_operand.hbm [shape: f32[3,128,128], index: 4, kind: input, shape index: {}]
  %s5 = inlined_call_operand.vmem [shape: f32[1,128], index: 5, kind: input, shape index: {}]
  %s6 = inlined_call_operand.hbm [shape: f32[3,128,128], index: 6, kind: input, shape index: {}]
  %s7 = inlined_call_operand.vmem [shape: f32[1,128], index: 7, kind: input, shape index: {}]
  %s8 = inlined_call_operand.hbm [shape: f32[2,8,128], index: 8, kind: output, shape index: {}]
  %s9 = sld [smem:[#allocation0]]
  $region85: #{tpu_custom_call.1} parent=0
    _
  %s11 = ssub.s32 1, %s9
  %s12 = scalar_select 0, %s11, %s9
  $region1: #{tpu_custom_call.1} parent=0
    #allocation2 [shape = 'u8[16384]{0}', space=vmem, size = 0x4000, scoped, tag = 'input window, operand 0']
    #allocation3 [shape = 's32[2]{0}', space=sflag, size = 0x8, scoped, tag = 'scoped memory for tpu_custom_call.1']
    #allocation4 [shape = 's32[2]{0}', space=sflag, size = 0x8, scoped, tag = 'scoped memory for tpu_custom_call.1']
    #allocation5 [shape = 'u8[32768]{0}', space=vmem, size = 0x8000, scoped, tag = 'input window, operand 1, single buffered']
    #allocation6 [shape = 's32[1]{0}', space=sflag, size = 0x4, scoped, tag = 'scoped memory for tpu_custom_call.1']
    #allocation7 [shape = 'u8[65536]{0}', space=vmem, size = 0x10000, scoped, tag = 'input window, operand 3, single buffered']
    #allocation8 [shape = 'u8[196608]{0}', space=vmem, size = 0x30000, scoped, tag = 'input window, operand 4, single buffered']
    #allocation9 [shape = 's32[1]{0}', space=sflag, size = 0x4, scoped, tag = 'scoped memory for tpu_custom_call.1']
    #allocation10 [shape = 'u8[196608]{0}', space=vmem, size = 0x30000, scoped, tag = 'input window, operand 6, single buffered']
    #allocation11 [shape = 'u8[8192]{0}', space=vmem, size = 0x2000, scoped, tag = 'output window, operand 0']
    %13 = vsyncpa [#allocation3], 0
    %s14 = scalar_lea.sflag [#allocation3], 1
    %15 = vsyncpa %s14, 0
    %16 = vsyncpa [#allocation6], 0
    %17 = vsyncpa [#allocation9], 0
    %18 = vsyncpa [#allocation4], 0
    %s19 = scalar_lea.sflag [#allocation4], 1
    %20 = vsyncpa %s19, 0
    loop: start=0, step=1, limit=4
    $region2: #{tpu_custom_call.1} parent=1 // loop_pre_header
      _
    $region3: #{tpu_custom_call.1} parent=1 // loop_header
      %s22 = sphi 0, %s26
      %p23 = scmp.ge.s32.totalorder %s22, 4
      %s32 = sphi 0, %s34
      %s35 = sphi 0, %s32
      %s36 = sphi 0, %s35
      %s52 = sphi 0, %s36
      %s56 = sphi 0, %s56
      %s58 = sphi 0, %s56
      %s59 = sphi 0, %s58
      %s73 = sphi 0, %s59
      %s77 = sphi 0, %s77
      %s79 = sphi 0, %s77
      %s80 = sphi 0, %s79
      %s94 = sphi 0, %s80
      %s98 = sphi 0, %s98
      %s100 = sphi 0, %s98
      %s101 = sphi 0, %s100
      %s115 = sphi 0, %s101
      %s119 = sphi 0, %s119
      %s121 = sphi 0, %s119
      %s122 = sphi 0, %s121
      %s136 = sphi 0, %s122
      %s140 = sphi 0, %s140
      %s142 = sphi 0, %s140
      %s143 = sphi 0, %s142
      %s157 = sphi 0, %s143
      %s161 = sphi 0, %s161
      %s163 = sphi 0, %s161
      %s164 = sphi 0, %s163
      %s178 = sphi 0, %s164
      %s182 = sphi 0, %s182
      %s184 = sphi 0, %s182
      %s185 = sphi 0, %s184
      %s199 = sphi 0, %s185
      %s205 = sphi 0, %s207
      %s208 = sphi 0, %s205
      %s209 = sphi 0, %s208
      %s225 = sphi 0, %s209
    $region4: #{tpu_custom_call.1} parent=1 // loop_header_branch
      %25 = sbr.rel (%p23) target = $region8
    $region5: #{tpu_custom_call.1} parent=1 // loop_body
      %s27 = ssub.s32 %s22, 1
      %s28 = ssub.s32 %s22, 2
      %s29 = sadd.s32 %s22, 1
      %s30 = ssub.s32 %s22, %s29
      %p31 = scmp.eq.s32.totalorder %s30, 0
      %s33 = sadd.s32 %s32, 1
      %s34 = scalar_select %p31, %s32, %s33
      %p37 = pneg %p31
      %p38 = scmp.eq.s32.totalorder %s22, 1
      %p39 = por %p37, %p38
      %p40 = scmp.ne.s32.totalorder %s32, %s35
      %p41 = scmp.eq.s32.totalorder %s22, 0
      %p42 = por %p40, %p41
      %p43 = scmp.ne.s32.totalorder %s32, %s35
      %p44 = scmp.eq.s32.totalorder %s27, 1
      %p45 = por %p43, %p44
      %p46 = scmp.ne.s32.totalorder %s35, %s36
      %p47 = scmp.eq.s32.totalorder %s27, 0
      %p48 = por %p46, %p47
      %p49 = scmp.ne.s32.totalorder %s35, %s36
      %p50 = scmp.eq.s32.totalorder %s28, 1
      %p51 = por %p49, %p50
      %p53 = scmp.ne.s32.totalorder %s36, %s52
      %p54 = scmp.eq.s32.totalorder %s28, 0
      %p55 = por %p53, %p54
      %s57 = sadd.s32 %s56, 1
      %p60 = scmp.eq.s32.totalorder %s22, 1
      %p61 = scmp.ne.s32.totalorder %s56, %s58
      %p62 = scmp.eq.s32.totalorder %s22, 0
      %p63 = por %p61, %p62
      %p64 = scmp.ne.s32.totalorder %s56, %s58
      %p65 = scmp.eq.s32.totalorder %s27, 1
      %p66 = por %p64, %p65
      %p67 = scmp.ne.s32.totalorder %s58, %s59
      %p68 = scmp.eq.s32.totalorder %s27, 0
      %p69 = por %p67, %p68
      %p70 = scmp.ne.s32.totalorder %s58, %s59
      %p71 = scmp.eq.s32.totalorder %s28, 1
      %p72 = por %p70, %p71
      %p74 = scmp.ne.s32.totalorder %s59, %s73
      %p75 = scmp.eq.s32.totalorder %s28, 0
      %p76 = por %p74, %p75
      %s78 = sadd.s32 %s77, 1
      %p81 = scmp.eq.s32.totalorder %s22, 1
      %p82 = scmp.ne.s32.totalorder %s77, %s79
      %p83 = scmp.eq.s32.totalorder %s22, 0
      %p84 = por %p82, %p83
      %p85 = scmp.ne.s32.totalorder %s77, %s79
      %p86 = scmp.eq.s32.totalorder %s27, 1
      %p87 = por %p85, %p86
      %p88 = scmp.ne.s32.totalorder %s79, %s80
      %p89 = scmp.eq.s32.totalorder %s27, 0
      %p90 = por %p88, %p89
      %p91 = scmp.ne.s32.totalorder %s79, %s80
      %p92 = scmp.eq.s32.totalorder %s28, 1
      %p93 = por %p91, %p92
      %p95 = scmp.ne.s32.totalorder %s80, %s94
      %p96 = scmp.eq.s32.totalorder %s28, 0
      %p97 = por %p95, %p96
      %s99 = sadd.s32 %s98, 1
      %p102 = scmp.eq.s32.totalorder %s22, 1
      %p103 = scmp.ne.s32.totalorder %s98, %s100
      %p104 = scmp.eq.s32.totalorder %s22, 0
      %p105 = por %p103, %p104
      %p106 = scmp.ne.s32.totalorder %s98, %s100
      %p107 = scmp.eq.s32.totalorder %s27, 1
      %p108 = por %p106, %p107
      %p109 = scmp.ne.s32.totalorder %s100, %s101
      %p110 = scmp.eq.s32.totalorder %s27, 0
      %p111 = por %p109, %p110
      %p112 = scmp.ne.s32.totalorder %s100, %s101
      %p113 = scmp.eq.s32.totalorder %s28, 1
      %p114 = por %p112, %p113
      %p116 = scmp.ne.s32.totalorder %s101, %s115
      %p117 = scmp.eq.s32.totalorder %s28, 0
      %p118 = por %p116, %p117
      %s120 = sadd.s32 %s119, 1
      %p123 = scmp.eq.s32.totalorder %s22, 1
      %p124 = scmp.ne.s32.totalorder %s119, %s121
      %p125 = scmp.eq.s32.totalorder %s22, 0
      %p126 = por %p124, %p125
      %p127 = scmp.ne.s32.totalorder %s119, %s121
      %p128 = scmp.eq.s32.totalorder %s27, 1
      %p129 = por %p127, %p128
      %p130 = scmp.ne.s32.totalorder %s121, %s122
      %p131 = scmp.eq.s32.totalorder %s27, 0
      %p132 = por %p130, %p131
      %p133 = scmp.ne.s32.totalorder %s121, %s122
      %p134 = scmp.eq.s32.totalorder %s28, 1
      %p135 = por %p133, %p134
      %p137 = scmp.ne.s32.totalorder %s122, %s136
      %p138 = scmp.eq.s32.totalorder %s28, 0
      %p139 = por %p137, %p138
      %s141 = sadd.s32 %s140, 1
      %p144 = scmp.eq.s32.totalorder %s22, 1
      %p145 = scmp.ne.s32.totalorder %s140, %s142
      %p146 = scmp.eq.s32.totalorder %s22, 0
      %p147 = por %p145, %p146
      %p148 = scmp.ne.s32.totalorder %s140, %s142
      %p149 = scmp.eq.s32.totalorder %s27, 1
      %p150 = por %p148, %p149
      %p151 = scmp.ne.s32.totalorder %s142, %s143
      %p152 = scmp.eq.s32.totalorder %s27, 0
      %p153 = por %p151, %p152
      %p154 = scmp.ne.s32.totalorder %s142, %s143
      %p155 = scmp.eq.s32.totalorder %s28, 1
      %p156 = por %p154, %p155
      %p158 = scmp.ne.s32.totalorder %s143, %s157
      %p159 = scmp.eq.s32.totalorder %s28, 0
      %p160 = por %p158, %p159
      %s162 = sadd.s32 %s161, 1
      %p165 = scmp.eq.s32.totalorder %s22, 1
      %p166 = scmp.ne.s32.totalorder %s161, %s163
      %p167 = scmp.eq.s32.totalorder %s22, 0
      %p168 = por %p166, %p167
      %p169 = scmp.ne.s32.totalorder %s161, %s163
      %p170 = scmp.eq.s32.totalorder %s27, 1
      %p171 = por %p169, %p170
      %p172 = scmp.ne.s32.totalorder %s163, %s164
      %p173 = scmp.eq.s32.totalorder %s27, 0
      %p174 = por %p172, %p173
      %p175 = scmp.ne.s32.totalorder %s163, %s164
      %p176 = scmp.eq.s32.totalorder %s28, 1
      %p177 = por %p175, %p176
      %p179 = scmp.ne.s32.totalorder %s164, %s178
      %p180 = scmp.eq.s32.totalorder %s28, 0
      %p181 = por %p179, %p180
      %s183 = sadd.s32 %s182, 1
      %p186 = scmp.eq.s32.totalorder %s22, 1
      %p187 = scmp.ne.s32.totalorder %s182, %s184
      %p188 = scmp.eq.s32.totalorder %s22, 0
      %p189 = por %p187, %p188
      %p190 = scmp.ne.s32.totalorder %s182, %s184
      %p191 = scmp.eq.s32.totalorder %s27, 1
      %p192 = por %p190, %p191
      %p193 = scmp.ne.s32.totalorder %s184, %s185
      %p194 = scmp.eq.s32.totalorder %s27, 0
      %p195 = por %p193, %p194
      %p196 = scmp.ne.s32.totalorder %s184, %s185
      %p197 = scmp.eq.s32.totalorder %s28, 1
      %p198 = por %p196, %p197
      %p200 = scmp.ne.s32.totalorder %s185, %s199
      %p201 = scmp.eq.s32.totalorder %s28, 0
      %p202 = por %p200, %p201
      %s203 = ssub.s32 %s22, %s29
      %p204 = scmp.eq.s32.totalorder %s203, 0
      %s206 = sadd.s32 %s205, 1
      %s207 = scalar_select %p204, %s205, %s206
      %p210 = pneg %p204
      %p211 = scmp.eq.s32.totalorder %s22, 1
      %p212 = por %p210, %p211
      %p213 = scmp.ne.s32.totalorder %s205, %s208
      %p214 = scmp.eq.s32.totalorder %s22, 0
      %p215 = por %p213, %p214
      %p216 = scmp.ne.s32.totalorder %s205, %s208
      %p217 = scmp.eq.s32.totalorder %s27, 1
      %p218 = por %p216, %p217
      %p219 = scmp.ne.s32.totalorder %s208, %s209
      %p220 = scmp.eq.s32.totalorder %s27, 0
      %p221 = por %p219, %p220
      %p222 = scmp.ne.s32.totalorder %s208, %s209
      %p223 = scmp.eq.s32.totalorder %s28, 1
      %p224 = por %p222, %p223
      %p226 = scmp.ne.s32.totalorder %s209, %s225
      %p227 = scmp.eq.s32.totalorder %s28, 0
      %p228 = por %p226, %p227
      %p229 = scmp.le.s32.totalorder 1, %s22
      %p230 = scmp.lt.s32.totalorder %s22, 3
      %p231 = pnand %p229, %p230
      %p232 = pneg %p231
      // Predicated region
      $region9: #{tpu_custom_call.1} parent=5 // pred_check
        _
      $region10: #{tpu_custom_call.1} parent=5 // pred_check_branch
        %234 = sbr.rel (%p231) target = $region12
      $region11: #{tpu_custom_call.1} parent=5 // pred_region
        %s235 = ssub.s32 %s22, 1
        // Predicated region
        $region13: #{tpu_custom_call.1} parent=11 // pred_check
          %p236 = pneg %p69
        $region14: #{tpu_custom_call.1} parent=11 // pred_check_branch
          %238 = sbr.rel (%p236) target = $region16
        $region15: #{tpu_custom_call.1} parent=11 // pred_region
          %240 = vsyncadd [#allocation6], 0
          %s241 = sshll.u32 %s1, 4
          %s242 = int_to_ptr.hbm [resolvable:$true] %s241
          %s243 = sshll.u32 [#allocation5], 4
          %s244 = int_to_ptr.vmem [resolvable:$true] %s243
          %249 = dma.hbm_to_vmem [thread:$0]  %s242, 1024, %s244, [#allocation6], 128, 128, 8
        $region16: #{tpu_custom_call.1} parent=11 // pred_fallthru
          _
        // Predicated region
        $region17: #{tpu_custom_call.1} parent=11 // pred_check
          %p250 = pneg %p90
        $region18: #{tpu_custom_call.1} parent=11 // pred_check_branch
          %252 = sbr.rel (%p250) target = $region20
        $region19: #{tpu_custom_call.1} parent=11 // pred_region
          _
        $region20: #{tpu_custom_call.1} parent=11 // pred_fallthru
          _
        // Predicated region
        $region21: #{tpu_custom_call.1} parent=11 // pred_check
          %p253 = pneg %p111
        $region22: #{tpu_custom_call.1} parent=11 // pred_check_branch
          %255 = sbr.rel (%p253) target = $region24
        $region23: #{tpu_custom_call.1} parent=11 // pred_region
          %257 = vsyncadd [#allocation6], 0
          %s258 = sshll.u32 %s3, 4
          %s259 = int_to_ptr.hbm [resolvable:$true] %s258
          %s260 = sshll.u32 [#allocation7], 4
          %s261 = int_to_ptr.vmem [resolvable:$true] %s260
          %266 = dma.hbm_to_vmem [thread:$0]  %s259, 2048, %s261, [#allocation6], 128, 128, 8
        $region24: #{tpu_custom_call.1} parent=11 // pred_fallthru
          _
        // Predicated region
        $region25: #{tpu_custom_call.1} parent=11 // pred_check
          %p267 = pneg %p132
        $region26: #{tpu_custom_call.1} parent=11 // pred_check_branch
          %269 = sbr.rel (%p267) target = $region28
        $region27: #{tpu_custom_call.1} parent=11 // pred_region
          %271 = vsyncadd [#allocation9], 0
          %s272 = sshll.u32 %s4, 4
          %s273 = int_to_ptr.hbm [resolvable:$true] %s272
          %s274 = sshll.u32 [#allocation8], 4
          %s275 = int_to_ptr.vmem [resolvable:$true] %s274
          %280 = dma.hbm_to_vmem [thread:$0]  %s273, 6144, %s275, [#allocation9], 128, 128, 8
        $region28: #{tpu_custom_call.1} parent=11 // pred_fallthru
          _
        // Predicated region
        $region29: #{tpu_custom_call.1} parent=11 // pred_check
          %p281 = pneg %p153
        $region30: #{tpu_custom_call.1} parent=11 // pred_check_branch
          %283 = sbr.rel (%p281) target = $region32
        $region31: #{tpu_custom_call.1} parent=11 // pred_region
          _
        $region32: #{tpu_custom_call.1} parent=11 // pred_fallthru
          _
        // Predicated region
        $region33: #{tpu_custom_call.1} parent=11 // pred_check
          %p284 = pneg %p174
        $region34: #{tpu_custom_call.1} parent=11 // pred_check_branch
          %286 = sbr.rel (%p284) target = $region36
        $region35: #{tpu_custom_call.1} parent=11 // pred_region
          %288 = vsyncadd [#allocation9], 0
          %s289 = sshll.u32 %s6, 4
          %s290 = int_to_ptr.hbm [resolvable:$true] %s289
          %s291 = sshll.u32 [#allocation10], 4
          %s292 = int_to_ptr.vmem [resolvable:$true] %s291
          %297 = dma.hbm_to_vmem [thread:$0]  %s290, 6144, %s292, [#allocation9], 128, 128, 8
        $region36: #{tpu_custom_call.1} parent=11 // pred_fallthru
          _
        // Predicated region
        $region37: #{tpu_custom_call.1} parent=11 // pred_check
          %p298 = pneg %p195
        $region38: #{tpu_custom_call.1} parent=11 // pred_check_branch
          %300 = sbr.rel (%p298) target = $region40
        $region39: #{tpu_custom_call.1} parent=11 // pred_region
          _
        $region40: #{tpu_custom_call.1} parent=11 // pred_fallthru
          _
      $region12: #{tpu_custom_call.1} parent=5 // pred_fallthru
        _
      %p301 = scmp.lt.s32.totalorder %s22, 2
      // Predicated region
      $region41: #{tpu_custom_call.1} parent=5 // pred_check
        %p302 = pneg %p301
      $region42: #{tpu_custom_call.1} parent=5 // pred_check_branch
        %304 = sbr.rel (%p302) target = $region44
      $region43: #{tpu_custom_call.1} parent=5 // pred_region
        // Predicated region
        $region45: #{tpu_custom_call.1} parent=43 // pred_check
          %p305 = pneg %p42
        $region46: #{tpu_custom_call.1} parent=43 // pred_check_branch
          %307 = sbr.rel (%p305) target = $region48
        $region47: #{tpu_custom_call.1} parent=43 // pred_region
          %s308 = sand.u32 %s32, 1
          %s309 = scalar_lea.sflag [#allocation3], %s308
          %s310 = sand.u32 %s32, 1
          %s311 = smul.addr %s310, 16
          %s312 = scalar_lea.vmem [#allocation2], %s311
          %314 = vsyncadd %s309, 0
          %s315 = smul.addr %s22, 2
          %s316 = smul.addr %s315, 8
          %s317 = scalar_lea.hbm %s0, %s316
          %s318 = sshll.u32 %s317, 4
          %s319 = int_to_ptr.hbm [resolvable:$true] %s318
          %s320 = sshll.u32 %s312, 4
          %s321 = int_to_ptr.vmem [resolvable:$true] %s320
          %326 = dma.hbm_to_vmem [thread:$0]  %s319, 256, %s321, %s309, 128, 128, 8
        $region48: #{tpu_custom_call.1} parent=43 // pred_fallthru
          _
      $region44: #{tpu_custom_call.1} parent=5 // pred_fallthru
        _
      %p327 = scmp.le.s32.totalorder 1, %s22
      %p328 = scmp.lt.s32.totalorder %s22, 3
      %p329 = pnand %p327, %p328
      %p330 = pneg %p329
      // Predicated region
      $region49: #{tpu_custom_call.1} parent=5 // pred_check
        _
      $region50: #{tpu_custom_call.1} parent=5 // pred_check_branch
        %332 = sbr.rel (%p329) target = $region52
      $region51: #{tpu_custom_call.1} parent=5 // pred_region
        %s333 = ssub.s32 %s22, 1
        %s334 = sand.u32 %s35, 1
        %s335 = scalar_lea.sflag [#allocation3], %s334
        %s336 = sand.u32 %s35, 1
        %s337 = smul.addr %s336, 16
        %s338 = scalar_lea.vmem [#allocation2], %s337
        // Predicated region
        $region53: #{tpu_custom_call.1} parent=51 // pred_check
          %p339 = pneg %p48
        $region54: #{tpu_custom_call.1} parent=51 // pred_check_branch
          %341 = sbr.rel (%p339) target = $region56
        $region55: #{tpu_custom_call.1} parent=51 // pred_region
          %343 = dma.done %s335, 256
        $region56: #{tpu_custom_call.1} parent=51 // pred_fallthru
          _
        // Predicated region
        $region57: #{tpu_custom_call.1} parent=51 // pred_check
          %p344 = pneg %p69
        $region58: #{tpu_custom_call.1} parent=51 // pred_check_branch
          %346 = sbr.rel (%p344) target = $region60
        $region59: #{tpu_custom_call.1} parent=51 // pred_region
          %348 = dma.done [#allocation6], 1024
        $region60: #{tpu_custom_call.1} parent=51 // pred_fallthru
          _
        // Predicated region
        $region61: #{tpu_custom_call.1} parent=51 // pred_check
          %p349 = pneg %p111
        $region62: #{tpu_custom_call.1} parent=51 // pred_check_branch
          %351 = sbr.rel (%p349) target = $region64
        $region63: #{tpu_custom_call.1} parent=51 // pred_region
          %353 = dma.done [#allocation6], 2048
        $region64: #{tpu_custom_call.1} parent=51 // pred_fallthru
          _
        // Predicated region
        $region65: #{tpu_custom_call.1} parent=51 // pred_check
          %p354 = pneg %p132
        $region66: #{tpu_custom_call.1} parent=51 // pred_check_branch
          %356 = sbr.rel (%p354) target = $region68
        $region67: #{tpu_custom_call.1} parent=51 // pred_region
          %358 = dma.done [#allocation9], 6144
        $region68: #{tpu_custom_call.1} parent=51 // pred_fallthru
          _
        // Predicated region
        $region69: #{tpu_custom_call.1} parent=51 // pred_check
          %p359 = pneg %p174
        $region70: #{tpu_custom_call.1} parent=51 // pred_check_branch
          %361 = sbr.rel (%p359) target = $region72
        $region71: #{tpu_custom_call.1} parent=51 // pred_region
          %363 = dma.done [#allocation9], 6144
        $region72: #{tpu_custom_call.1} parent=51 // pred_fallthru
          _
        %s364 = sand.u32 %s35, 1
        %s365 = scalar_lea.sflag [#allocation3], %s364
        %s366 = sand.u32 %s35, 1
        %s367 = smul.addr %s366, 16
        %s368 = scalar_lea.vmem [#allocation2], %s367
        %p369 = pneg %p48
        %p370 = pneg %p45
        %p371 = pneg %p69
        %p372 = pneg %p66
        %p373 = pneg %p90
        %p374 = pneg %p87
        %p375 = pneg %p111
        %p376 = pneg %p108
        %p377 = pneg %p132
        %p378 = pneg %p129
        %p379 = pneg %p153
        %p380 = pneg %p150
        %p381 = pneg %p174
        %p382 = pneg %p171
        %p383 = pneg %p195
        %p384 = pneg %p192
        %p385 = pneg %p221
        %p386 = pneg %p218
        %s387 = sand.u32 %s208, 1
        %s388 = scalar_lea.sflag [#allocation4], %s387
        %s389 = sand.u32 %s208, 1
        %s390 = smul.addr %s389, 8
        %s391 = scalar_lea.vmem [#allocation11], %s390
        %v392 = vld [vmem:[%s338] sm:$0xff]
        %v393 = vld [vmem:[%s338 + $0x8] sm:$0xff]
        %v395 = vunpack.c.l.s4 1966171168
        %v396 = vunpack.c.0.s8 %v395
        %v397 = vperm.slane %v392, %v396
        %v399 = vunpack.c.l.s4 1966171168
        %v400 = vunpack.c.0.s8 %v399
        %v401 = vperm.slane %v393, %v400
        %v404 = vrot.slane %v397, 4
        %v405 = vrot.slane %v401, 4
        %v408 = vmax.f32 %v397, %v404
        %v409 = vmax.f32 %v401, %v405
        %412 = vrot.lane.b32.xlu0 %v408, 112
        %v413 = vpop.permute.xlu0 %412
        %414 = vrot.lane.b32.xlu0 %v409, 112
        %v415 = vpop.permute.xlu0 %414
        %418 = vrot.lane.b32.xlu0 %v408, 96
        %v419 = vpop.permute.xlu0 %418
        %420 = vrot.lane.b32.xlu0 %v409, 96
        %v421 = vpop.permute.xlu0 %420
        %424 = vrot.lane.b32.xlu0 %v408, 80
        %v425 = vpop.permute.xlu0 %424
        %426 = vrot.lane.b32.xlu0 %v409, 80
        %v427 = vpop.permute.xlu0 %426
        %430 = vrot.lane.b32.xlu0 %v408, 64
        %v431 = vpop.permute.xlu0 %430
        %432 = vrot.lane.b32.xlu0 %v409, 64
        %v433 = vpop.permute.xlu0 %432
        %436 = vrot.lane.b32.xlu0 %v408, 48
        %v437 = vpop.permute.xlu0 %436
        %438 = vrot.lane.b32.xlu0 %v409, 48
        %v439 = vpop.permute.xlu0 %438
        %442 = vrot.lane.b32.xlu0 %v408, 32
        %v443 = vpop.permute.xlu0 %442
        %444 = vrot.lane.b32.xlu0 %v409, 32
        %v445 = vpop.permute.xlu0 %444
        %448 = vrot.lane.b32.xlu0 %v408, 16
        %v449 = vpop.permute.xlu0 %448
        %450 = vrot.lane.b32.xlu0 %v409, 16
        %v451 = vpop.permute.xlu0 %450
        %v454 = vrot.slane %v419, 4
        %vm455 = vcmask 1047556
        %v456 = vsel %vm455, %v454, %v408
        %v458 = vunpack.c.l.s4 1983009808
        %v459 = vunpack.c.0.s8 %v458
        %v460 = vperm.slane %v456, %v459
        %v461 = vrot.slane %v425, 4
        %v462 = vsel %vm455, %v461, %v413
        %v464 = vunpack.c.l.s4 1983009808
        %v465 = vunpack.c.0.s8 %v464
        %v466 = vperm.slane %v462, %v465
        %v467 = vrot.slane %v466, 4
        %v468 = vsel %vm455, %v467, %v460
        %v469 = vrot.slane %v460, 4
        %v470 = vsel %vm455, %v466, %v469
        %v472 = vunpack.c.l.s4 1934713408
        %v473 = vunpack.c.0.s8 %v472
        %v474 = vperm.slane %v468, %v473
        %v476 = vunpack.c.l.s4 1934713408
        %v477 = vunpack.c.0.s8 %v476
        %v478 = vperm.slane %v470, %v477
        %v479 = vrot.slane %v474, 4
        %v480 = vsel %vm455, 0.0, %v479
        %v481 = vrot.slane %v478, 4
        %v482 = vsel %vm455, 0.0, %v481
        %v483 = vrot.slane %v443, 4
        %v484 = vsel %vm455, %v483, %v431
        %v486 = vunpack.c.l.s4 1983009808
        %v487 = vunpack.c.0.s8 %v486
        %v488 = vperm.slane %v484, %v487
        %v489 = vrot.slane %v449, 4
        %v490 = vsel %vm455, %v489, %v437
        %v492 = vunpack.c.l.s4 1983009808
        %v493 = vunpack.c.0.s8 %v492
        %v494 = vperm.slane %v490, %v493
        %v495 = vrot.slane %v494, 4
        %v496 = vsel %vm455, %v495, %v488
        %v497 = vrot.slane %v488, 4
        %v498 = vsel %vm455, %v494, %v497
        %v500 = vunpack.c.l.s4 1934713408
        %v501 = vunpack.c.0.s8 %v500
        %v502 = vperm.slane %v496, %v501
        %v504 = vunpack.c.l.s4 1934713408
        %v505 = vunpack.c.0.s8 %v504
        %v506 = vperm.slane %v498, %v505
        %v507 = vrot.slane %v502, 4
        %v508 = vsel %vm455, 0.0, %v507
        %v509 = vrot.slane %v506, 4
        %v510 = vsel %vm455, 0.0, %v509
        %v511 = vrot.slane %v421, 4
        %v512 = vsel %vm455, %v511, %v409
        %v514 = vunpack.c.l.s4 1983009808
        %v515 = vunpack.c.0.s8 %v514
        %v516 = vperm.slane %v512, %v515
        %v517 = vrot.slane %v427, 4
        %v518 = vsel %vm455, %v517, %v415
        %v520 = vunpack.c.l.s4 1983009808
        %v521 = vunpack.c.0.s8 %v520
        %v522 = vperm.slane %v518, %v521
        %v523 = vrot.slane %v522, 4
        %v524 = vsel %vm455, %v523, %v516
        %v525 = vrot.slane %v516, 4
        %v526 = vsel %vm455, %v522, %v525
        %v528 = vunpack.c.l.s4 1934713408
        %v529 = vunpack.c.0.s8 %v528
        %v530 = vperm.slane %v524, %v529
        %v532 = vunpack.c.l.s4 1934713408
        %v533 = vunpack.c.0.s8 %v532
        %v534 = vperm.slane %v526, %v533
        %v535 = vrot.slane %v530, 4
        %v536 = vsel %vm455, 0.0, %v535
        %v537 = vrot.slane %v534, 4
        %v538 = vsel %vm455, 0.0, %v537
        %v539 = vrot.slane %v445, 4
        %v540 = vsel %vm455, %v539, %v433
        %v542 = vunpack.c.l.s4 1983009808
        %v543 = vunpack.c.0.s8 %v542
        %v544 = vperm.slane %v540, %v543
        %v545 = vrot.slane %v451, 4
        %v546 = vsel %vm455, %v545, %v439
        %v548 = vunpack.c.l.s4 1983009808
        %v549 = vunpack.c.0.s8 %v548
        %v550 = vperm.slane %v546, %v549
        %v551 = vrot.slane %v550, 4
        %v552 = vsel %vm455, %v551, %v544
        %v553 = vrot.slane %v544, 4
        %v554 = vsel %vm455, %v550, %v553
        %v556 = vunpack.c.l.s4 1934713408
        %v557 = vunpack.c.0.s8 %v556
        %v558 = vperm.slane %v552, %v557
        %v560 = vunpack.c.l.s4 1934713408
        %v561 = vunpack.c.0.s8 %v560
        %v562 = vperm.slane %v554, %v561
        %v563 = vrot.slane %v558, 4
        %v564 = vsel %vm455, 0.0, %v563
        %v565 = vrot.slane %v562, 4
        %v566 = vsel %vm455, 0.0, %v565
        %583 = vrot.lane.b32.xlu0 %v474, 120
        %v584 = vpop.permute.xlu0 %583
        %585 = vrot.lane.b32.xlu0 %v502, 120
        %v586 = vpop.permute.xlu0 %585
        %587 = vrot.lane.b32.xlu0 %v480, 120
        %v588 = vpop.permute.xlu0 %587
        %589 = vrot.lane.b32.xlu0 %v508, 120
        %v590 = vpop.permute.xlu0 %589
        %591 = vrot.lane.b32.xlu0 %v478, 120
        %v592 = vpop.permute.xlu0 %591
        %593 = vrot.lane.b32.xlu0 %v506, 120
        %v594 = vpop.permute.xlu0 %593
        %595 = vrot.lane.b32.xlu0 %v482, 120
        %v596 = vpop.permute.xlu0 %595
        %597 = vrot.lane.b32.xlu0 %v510, 120
        %v598 = vpop.permute.xlu0 %597
        %599 = vrot.lane.b32.xlu0 %v530, 120
        %v600 = vpop.permute.xlu0 %599
        %601 = vrot.lane.b32.xlu0 %v558, 120
        %v602 = vpop.permute.xlu0 %601
        %603 = vrot.lane.b32.xlu0 %v536, 120
        %v604 = vpop.permute.xlu0 %603
        %605 = vrot.lane.b32.xlu0 %v564, 120
        %v606 = vpop.permute.xlu0 %605
        %607 = vrot.lane.b32.xlu0 %v534, 120
        %v608 = vpop.permute.xlu0 %607
        %609 = vrot.lane.b32.xlu0 %v562, 120
        %v610 = vpop.permute.xlu0 %609
        %611 = vrot.lane.b32.xlu0 %v538, 120
        %v612 = vpop.permute.xlu0 %611
        %613 = vrot.lane.b32.xlu0 %v566, 120
        %v614 = vpop.permute.xlu0 %613
        %v631 = vmax.f32 %v474, %v584
        %v632 = vmax.f32 %v502, %v586
        %v633 = vmax.f32 %v480, %v588
        %v634 = vmax.f32 %v508, %v590
        %v635 = vmax.f32 %v478, %v592
        %v636 = vmax.f32 %v506, %v594
        %v637 = vmax.f32 %v482, %v596
        %v638 = vmax.f32 %v510, %v598
        %v639 = vmax.f32 %v530, %v600
        %v640 = vmax.f32 %v558, %v602
        %v641 = vmax.f32 %v536, %v604
        %v642 = vmax.f32 %v564, %v606
        %v643 = vmax.f32 %v534, %v608
        %v644 = vmax.f32 %v562, %v610
        %v645 = vmax.f32 %v538, %v612
        %v646 = vmax.f32 %v566, %v614
        %v647 = vrot.slane %v635, 4
        %v648 = vsel %vm455, %v647, %v631
        %v650 = vunpack.c.l.s4 1983009808
        %v651 = vunpack.c.0.s8 %v650
        %v652 = vperm.slane %v648, %v651
        %v653 = vrot.slane %v637, 4
        %v654 = vsel %vm455, %v653, %v633
        %v656 = vunpack.c.l.s4 1983009808
        %v657 = vunpack.c.0.s8 %v656
        %v658 = vperm.slane %v654, %v657
        %v659 = vrot.slane %v658, 4
        %v660 = vsel %vm455, %v659, %v652
        %v661 = vrot.slane %v652, 4
        %v662 = vsel %vm455, %v658, %v661
        %v664 = vunpack.c.l.s4 1934713408
        %v665 = vunpack.c.0.s8 %v664
        %v666 = vperm.slane %v660, %v665
        %v668 = vunpack.c.l.s4 1934713408
        %v669 = vunpack.c.0.s8 %v668
        %v670 = vperm.slane %v662, %v669
        %v671 = vrot.slane %v666, 4
        %v672 = vsel %vm455, 0.0, %v671
        %v673 = vrot.slane %v670, 4
        %v674 = vsel %vm455, 0.0, %v673
        %v675 = vrot.slane %v643, 4
        %v676 = vsel %vm455, %v675, %v639
        %v678 = vunpack.c.l.s4 1983009808
        %v679 = vunpack.c.0.s8 %v678
        %v680 = vperm.slane %v676, %v679
        %v681 = vrot.slane %v645, 4
        %v682 = vsel %vm455, %v681, %v641
        %v684 = vunpack.c.l.s4 1983009808
        %v685 = vunpack.c.0.s8 %v684
        %v686 = vperm.slane %v682, %v685
        %v687 = vrot.slane %v686, 4
        %v688 = vsel %vm455, %v687, %v680
        %v689 = vrot.slane %v680, 4
        %v690 = vsel %vm455, %v686, %v689
        %v692 = vunpack.c.l.s4 1934713408
        %v693 = vunpack.c.0.s8 %v692
        %v694 = vperm.slane %v688, %v693
        %v696 = vunpack.c.l.s4 1934713408
        %v697 = vunpack.c.0.s8 %v696
        %v698 = vperm.slane %v690, %v697
        %v699 = vrot.slane %v694, 4
        %v700 = vsel %vm455, 0.0, %v699
        %v701 = vrot.slane %v698, 4
        %v702 = vsel %vm455, 0.0, %v701
        %v703 = vrot.slane %v636, 4
        %v704 = vsel %vm455, %v703, %v632
        %v706 = vunpack.c.l.s4 1983009808
        %v707 = vunpack.c.0.s8 %v706
        %v708 = vperm.slane %v704, %v707
        %v709 = vrot.slane %v638, 4
        %v710 = vsel %vm455, %v709, %v634
        %v712 = vunpack.c.l.s4 1983009808
        %v713 = vunpack.c.0.s8 %v712
        %v714 = vperm.slane %v710, %v713
        %v715 = vrot.slane %v714, 4
        %v716 = vsel %vm455, %v715, %v708
        %v717 = vrot.slane %v708, 4
        %v718 = vsel %vm455, %v714, %v717
        %v720 = vunpack.c.l.s4 1934713408
        %v721 = vunpack.c.0.s8 %v720
        %v722 = vperm.slane %v716, %v721
        %v724 = vunpack.c.l.s4 1934713408
        %v725 = vunpack.c.0.s8 %v724
        %v726 = vperm.slane %v718, %v725
        %v727 = vrot.slane %v722, 4
        %v728 = vsel %vm455, 0.0, %v727
        %v729 = vrot.slane %v726, 4
        %v730 = vsel %vm455, 0.0, %v729
        %v731 = vrot.slane %v644, 4
        %v732 = vsel %vm455, %v731, %v640
        %v734 = vunpack.c.l.s4 1983009808
        %v735 = vunpack.c.0.s8 %v734
        %v736 = vperm.slane %v732, %v735
        %v737 = vrot.slane %v646, 4
        %v738 = vsel %vm455, %v737, %v642
        %v740 = vunpack.c.l.s4 1983009808
        %v741 = vunpack.c.0.s8 %v740
        %v742 = vperm.slane %v738, %v741
        %v743 = vrot.slane %v742, 4
        %v744 = vsel %vm455, %v743, %v736
        %v745 = vrot.slane %v736, 4
        %v746 = vsel %vm455, %v742, %v745
        %v748 = vunpack.c.l.s4 1934713408
        %v749 = vunpack.c.0.s8 %v748
        %v750 = vperm.slane %v744, %v749
        %v752 = vunpack.c.l.s4 1934713408
        %v753 = vunpack.c.0.s8 %v752
        %v754 = vperm.slane %v746, %v753
        %v755 = vrot.slane %v750, 4
        %v756 = vsel %vm455, 0.0, %v755
        %v757 = vrot.slane %v754, 4
        %v758 = vsel %vm455, 0.0, %v757
        %761 = vst [vmem:[#allocation1] ss:$2 sm:$0xff] %v666
        %s762 = scalar_lea.vmem [#allocation1], 1
        %763 = vst [vmem:[%s762] ss:$2 sm:$0xff] %v694
        %v764 = vld.sshfl [vmem:[#allocation1] sm:$0xff pattern:$0x75316420]
        %768 = vst [vmem:[#allocation1] ss:$2 sm:$0xff] %v672
        %s769 = scalar_lea.vmem [#allocation1], 1
        %770 = vst [vmem:[%s769] ss:$2 sm:$0xff] %v700
        %v771 = vld.sshfl [vmem:[#allocation1] sm:$0xff pattern:$0x75316420]
        %772 = vrot.lane.b32.xlu0 %v771, 8
        %v773 = vpop.permute.xlu0 %772
        %777 = vst [vmem:[#allocation1] ss:$2 sm:$0xff] %v670
        %s778 = scalar_lea.vmem [#allocation1], 1
        %779 = vst [vmem:[%s778] ss:$2 sm:$0xff] %v698
        %v780 = vld.sshfl [vmem:[#allocation1] sm:$0xff pattern:$0x75316420]
        %781 = vrot.lane.b32.xlu0 %v780, 16
        %v782 = vpop.permute.xlu0 %781
        %786 = vst [vmem:[#allocation1] ss:$2 sm:$0xff] %v674
        %s787 = scalar_lea.vmem [#allocation1], 1
        %788 = vst [vmem:[%s787] ss:$2 sm:$0xff] %v702
        %v789 = vld.sshfl [vmem:[#allocation1] sm:$0xff pattern:$0x75316420]
        %790 = vrot.lane.b32.xlu0 %v789, 24
        %v791 = vpop.permute.xlu0 %790
        %795 = vst [vmem:[#allocation1] ss:$2 sm:$0xff] %v722
        %s796 = scalar_lea.vmem [#allocation1], 1
        %797 = vst [vmem:[%s796] ss:$2 sm:$0xff] %v750
        %v798 = vld.sshfl [vmem:[#allocation1] sm:$0xff pattern:$0x75316420]
        %799 = vrot.lane.b32.xlu0 %v798, 32
        %v800 = vpop.permute.xlu0 %799
        %804 = vst [vmem:[#allocation1] ss:$2 sm:$0xff] %v728
        %s805 = scalar_lea.vmem [#allocation1], 1
        %806 = vst [vmem:[%s805] ss:$2 sm:$0xff] %v756
        %v807 = vld.sshfl [vmem:[#allocation1] sm:$0xff pattern:$0x75316420]
        %808 = vrot.lane.b32.xlu0 %v807, 40
        %v809 = vpop.permute.xlu0 %808
        %813 = vst [vmem:[#allocation1] ss:$2 sm:$0xff] %v726
        %s814 = scalar_lea.vmem [#allocation1], 1
        %815 = vst [vmem:[%s814] ss:$2 sm:$0xff] %v754
        %v816 = vld.sshfl [vmem:[#allocation1] sm:$0xff pattern:$0x75316420]
        %817 = vrot.lane.b32.xlu0 %v816, 48
        %v818 = vpop.permute.xlu0 %817
        %822 = vst [vmem:[#allocation1] ss:$2 sm:$0xff] %v730
        %s823 = scalar_lea.vmem [#allocation1], 1
        %824 = vst [vmem:[%s823] ss:$2 sm:$0xff] %v758
        %v825 = vld.sshfl [vmem:[#allocation1] sm:$0xff pattern:$0x75316420]
        %826 = vrot.lane.b32.xlu0 %v825, 56
        %v827 = vpop.permute.xlu0 %826
        %vm829 = vcmask 64512
        %v830 = vsel %vm829, %v764, %v773
        %vm831 = vcmask 130048
        %v832 = vsel %vm831, %v830, %v782
        %vm833 = vcmask 195584
        %v834 = vsel %vm833, %v832, %v791
        %vm835 = vcmask 261120
        %v836 = vsel %vm835, %v834, %v800
        %vm837 = vcmask 326656
        %v838 = vsel %vm837, %v836, %v809
        %vm839 = vcmask 392192
        %v840 = vsel %vm839, %v838, %v818
        %vm841 = vcmask 457728
        %v842 = vsel %vm841, %v840, %v827
        %v843 = vld [vmem:[#allocation5] sm:$0xff]
        %v844 = vld [vmem:[#allocation5 + $0x8] sm:$0xff]
        %v845 = vld [vmem:[#allocation5 + $0x10] sm:$0xff]
        %v846 = vld [vmem:[#allocation5 + $0x18] sm:$0xff]
        %v847 = vld [vmem:[#allocation5 + $0x20] sm:$0xff]
        %v848 = vld [vmem:[#allocation5 + $0x28] sm:$0xff]
        %v849 = vld [vmem:[#allocation5 + $0x30] sm:$0xff]
        %v850 = vld [vmem:[#allocation5 + $0x38] sm:$0xff]
        %v851 = vld [vmem:[%s2] sm:$0x1]
        %v853 = vperm.slane %v851, 0
        %vm855 = vcmask 523264
        %v857 = vsel %vm855, %v842, 0
        %859 = vmatpush.msra.mxu0 0.0
        %860 = vmatpush.msra.mxu0 0.0
        %861 = vmatpush.msra.mxu0 0.0
        %862 = vmatpush.msra.mxu0 0.0
        %863 = vmatpush.msra.mxu0 0.0
        %864 = vmatpush.msra.mxu0 0.0
        %865 = vmatpush.msra.mxu0 0.0
        %866 = vmatpush.msra.mxu0 0.0
        %867 = vmatpush.msra.mxu0 %v850
        %868 = vmatpush.msra.mxu0 %v849
        %869 = vmatpush.msra.mxu0 %v848
        %870 = vmatpush.msra.mxu0 %v847
        %871 = vmatpush.msra.mxu0 %v846
        %872 = vmatpush.msra.mxu0 %v845
        %873 = vmatpush.msra.mxu0 %v844
        %874 = vmatpush.msra.mxu0 %v843
        %875 = vmatmul.f32.gmra.mxu0 %v857
        %v876 = vpop.f32.mrf.mxu0
        %v877 = vadd.f32 %v853, %v876
        %878 = vdwg.mxu0
        %v880 = vrot.slane %v877, 7
        %vm882 = vcmask 1040384
        %v883 = vsel %vm882, 0.0, %v880
        %v884 = vrot.slane %v877, 1
        %vm886 = vcmask 1046528
        %v887 = vsel %vm886, %v884, 0.0
        %v888 = vld [vmem:[#allocation8] sm:$0xff]
        %v889 = vld [vmem:[#allocation8 + $0x8] sm:$0xff]
        %v890 = vld [vmem:[#allocation8 + $0x10] sm:$0xff]
        %v891 = vld [vmem:[#allocation8 + $0x18] sm:$0xff]
        %v892 = vld [vmem:[#allocation8 + $0x20] sm:$0xff]
        %v893 = vld [vmem:[#allocation8 + $0x28] sm:$0xff]
        %v894 = vld [vmem:[#allocation8 + $0x30] sm:$0xff]
        %v895 = vld [vmem:[#allocation8 + $0x38] sm:$0xff]
        %v896 = vld [vmem:[#allocation8 + $0x40] sm:$0xff]
        %v897 = vld [vmem:[#allocation8 + $0x48] sm:$0xff]
        %v898 = vld [vmem:[#allocation8 + $0x50] sm:$0xff]
        %v899 = vld [vmem:[#allocation8 + $0x58] sm:$0xff]
        %v900 = vld [vmem:[#allocation8 + $0x60] sm:$0xff]
        %v901 = vld [vmem:[#allocation8 + $0x68] sm:$0xff]
        %v902 = vld [vmem:[#allocation8 + $0x70] sm:$0xff]
        %v903 = vld [vmem:[#allocation8 + $0x78] sm:$0xff]
        %s904 = scalar_lea.vmem [#allocation8], 128
        %v905 = vld [vmem:[%s904] sm:$0xff]
        %v906 = vld [vmem:[%s904 + $0x8] sm:$0xff]
        %v907 = vld [vmem:[%s904 + $0x10] sm:$0xff]
        %v908 = vld [vmem:[%s904 + $0x18] sm:$0xff]
        %v909 = vld [vmem:[%s904 + $0x20] sm:$0xff]
        %v910 = vld [vmem:[%s904 + $0x28] sm:$0xff]
        %v911 = vld [vmem:[%s904 + $0x30] sm:$0xff]
        %v912 = vld [vmem:[%s904 + $0x38] sm:$0xff]
        %v913 = vld [vmem:[%s904 + $0x40] sm:$0xff]
        %v914 = vld [vmem:[%s904 + $0x48] sm:$0xff]
        %v915 = vld [vmem:[%s904 + $0x50] sm:$0xff]
        %v916 = vld [vmem:[%s904 + $0x58] sm:$0xff]
        %v917 = vld [vmem:[%s904 + $0x60] sm:$0xff]
        %v918 = vld [vmem:[%s904 + $0x68] sm:$0xff]
        %v919 = vld [vmem:[%s904 + $0x70] sm:$0xff]
        %v920 = vld [vmem:[%s904 + $0x78] sm:$0xff]
        %921 = vmatpush.msra.mxu0 %v920
        %922 = vmatpush.msra.mxu0 %v919
        %923 = vmatpush.msra.mxu0 %v918
        %924 = vmatpush.msra.mxu0 %v917
        %925 = vmatpush.msra.mxu0 %v916
        %926 = vmatpush.msra.mxu0 %v915
        %927 = vmatpush.msra.mxu0 %v914
        %928 = vmatpush.msra.mxu0 %v913
        %929 = vmatpush.msra.mxu0 %v912
        %930 = vmatpush.msra.mxu0 %v911
        %931 = vmatpush.msra.mxu0 %v910
        %932 = vmatpush.msra.mxu0 %v909
        %933 = vmatpush.msra.mxu0 %v908
        %934 = vmatpush.msra.mxu0 %v907
        %935 = vmatpush.msra.mxu0 %v906
        %936 = vmatpush.msra.mxu0 %v905
        %937 = vmatmul.f32.gmra.mxu0 %v877
        %v938 = vpop.f32.mrf.mxu0
        %v939 = vadd.f32 0.0, %v938
        %940 = vdwg.mxu0
        %941 = vmatpush.msra.mxu0 %v903
        %942 = vmatpush.msra.mxu0 %v902
        %943 = vmatpush.msra.mxu0 %v901
        %944 = vmatpush.msra.mxu0 %v900
        %945 = vmatpush.msra.mxu0 %v899
        %946 = vmatpush.msra.mxu0 %v898
        %947 = vmatpush.msra.mxu0 %v897
        %948 = vmatpush.msra.mxu0 %v896
        %949 = vmatpush.msra.mxu0 %v895
        %950 = vmatpush.msra.mxu0 %v894
        %951 = vmatpush.msra.mxu0 %v893
        %952 = vmatpush.msra.mxu0 %v892
        %953 = vmatpush.msra.mxu0 %v891
        %954 = vmatpush.msra.mxu0 %v890
        %955 = vmatpush.msra.mxu0 %v889
        %956 = vmatpush.msra.mxu0 %v888
        %957 = vmatmul.f32.gmra.mxu0 %v883
        %v958 = vpop.f32.mrf.mxu0
        %v959 = vadd.f32 %v939, %v958
        %960 = vdwg.mxu0
        %s961 = scalar_lea.vmem [#allocation8], 256
        %v962 = vld [vmem:[%s961] sm:$0xff]
        %v963 = vld [vmem:[%s961 + $0x8] sm:$0xff]
        %v964 = vld [vmem:[%s961 + $0x10] sm:$0xff]
        %v965 = vld [vmem:[%s961 + $0x18] sm:$0xff]
        %v966 = vld [vmem:[%s961 + $0x20] sm:$0xff]
        %v967 = vld [vmem:[%s961 + $0x28] sm:$0xff]
        %v968 = vld [vmem:[%s961 + $0x30] sm:$0xff]
        %v969 = vld [vmem:[%s961 + $0x38] sm:$0xff]
        %v970 = vld [vmem:[%s961 + $0x40] sm:$0xff]
        %v971 = vld [vmem:[%s961 + $0x48] sm:$0xff]
        %v972 = vld [vmem:[%s961 + $0x50] sm:$0xff]
        %v973 = vld [vmem:[%s961 + $0x58] sm:$0xff]
        %v974 = vld [vmem:[%s961 + $0x60] sm:$0xff]
        %v975 = vld [vmem:[%s961 + $0x68] sm:$0xff]
        %v976 = vld [vmem:[%s961 + $0x70] sm:$0xff]
        %v977 = vld [vmem:[%s961 + $0x78] sm:$0xff]
        %978 = vmatpush.msra.mxu0 %v977
        %979 = vmatpush.msra.mxu0 %v976
        %980 = vmatpush.msra.mxu0 %v975
        %981 = vmatpush.msra.mxu0 %v974
        %982 = vmatpush.msra.mxu0 %v973
        %983 = vmatpush.msra.mxu0 %v972
        %984 = vmatpush.msra.mxu0 %v971
        %985 = vmatpush.msra.mxu0 %v970
        %986 = vmatpush.msra.mxu0 %v969
        %987 = vmatpush.msra.mxu0 %v968
        %988 = vmatpush.msra.mxu0 %v967
        %989 = vmatpush.msra.mxu0 %v966
        %990 = vmatpush.msra.mxu0 %v965
        %991 = vmatpush.msra.mxu0 %v964
        %992 = vmatpush.msra.mxu0 %v963
        %993 = vmatpush.msra.mxu0 %v962
        %994 = vmatmul.f32.gmra.mxu0 %v887
        %v995 = vpop.f32.mrf.mxu0
        %v996 = vadd.f32 0.0, %v995
        %997 = vdwg.mxu0
        %v998 = vadd.f32 %v959, %v996
        %v999 = vld [vmem:[%s5] sm:$0x1]
        %v1001 = vperm.slane %v999, 0
        %v1003 = vadd.f32 %v998, %v1001
        %v1004 = vrot.slane %v1003, 4
        %v1005 = vadd.f32 %v1003, %v1004
        %v1006 = vrot.slane %v1005, 2
        %v1007 = vadd.f32 %v1005, %v1006
        %v1008 = vrot.slane %v1007, 1
        %v1009 = vadd.f32 %v1007, %v1008
        %v1010 = vld [vmem:[#allocation7] sm:$0xff]
        %v1011 = vld [vmem:[#allocation7 + $0x8] sm:$0xff]
        %v1012 = vld [vmem:[#allocation7 + $0x10] sm:$0xff]
        %v1013 = vld [vmem:[#allocation7 + $0x18] sm:$0xff]
        %v1014 = vld [vmem:[#allocation7 + $0x20] sm:$0xff]
        %v1015 = vld [vmem:[#allocation7 + $0x28] sm:$0xff]
        %v1016 = vld [vmem:[#allocation7 + $0x30] sm:$0xff]
        %v1017 = vld [vmem:[#allocation7 + $0x38] sm:$0xff]
        %v1018 = vld [vmem:[#allocation7 + $0x40] sm:$0xff]
        %v1019 = vld [vmem:[#allocation7 + $0x48] sm:$0xff]
        %v1020 = vld [vmem:[#allocation7 + $0x50] sm:$0xff]
        %v1021 = vld [vmem:[#allocation7 + $0x58] sm:$0xff]
        %v1022 = vld [vmem:[#allocation7 + $0x60] sm:$0xff]
        %v1023 = vld [vmem:[#allocation7 + $0x68] sm:$0xff]
        %v1024 = vld [vmem:[#allocation7 + $0x70] sm:$0xff]
        %v1025 = vld [vmem:[#allocation7 + $0x78] sm:$0xff]
        %1026 = vmatpush.msra.mxu0 %v1025
        %1027 = vmatpush.msra.mxu0 %v1024
        %1028 = vmatpush.msra.mxu0 %v1023
        %1029 = vmatpush.msra.mxu0 %v1022
        %1030 = vmatpush.msra.mxu0 %v1021
        %1031 = vmatpush.msra.mxu0 %v1020
        %1032 = vmatpush.msra.mxu0 %v1019
        %1033 = vmatpush.msra.mxu0 %v1018
        %1034 = vmatpush.msra.mxu0 %v1017
        %1035 = vmatpush.msra.mxu0 %v1016
        %1036 = vmatpush.msra.mxu0 %v1015
        %1037 = vmatpush.msra.mxu0 %v1014
        %1038 = vmatpush.msra.mxu0 %v1013
        %1039 = vmatpush.msra.mxu0 %v1012
        %1040 = vmatpush.msra.mxu0 %v1011
        %1041 = vmatpush.msra.mxu0 %v1010
        %1042 = vmatmul.f32.gmra.mxu0 %v1009
        %v1043 = vpop.f32.mrf.mxu0
        %v1044 = vadd.f32 0.0, %v1043
        %1045 = vdwg.mxu0
        %v1046 = vmul.f32 %v1044, 0.015625
        %v1047 = vperm.slane %v1046, 0
        %v1048 = vsub.f32 %v1003, %v1047
        %v1049 = vmul.f32 %v1048, %v1048
        %v1050 = vrot.slane %v1049, 4
        %v1051 = vadd.f32 %v1049, %v1050
        %v1052 = vrot.slane %v1051, 2
        %v1053 = vadd.f32 %v1051, %v1052
        %v1054 = vrot.slane %v1053, 1
        %v1055 = vadd.f32 %v1053, %v1054
        %1056 = vmatpush.msra.mxu0 %v1025
        %1057 = vmatpush.msra.mxu0 %v1024
        %1058 = vmatpush.msra.mxu0 %v1023
        %1059 = vmatpush.msra.mxu0 %v1022
        %1060 = vmatpush.msra.mxu0 %v1021
        %1061 = vmatpush.msra.mxu0 %v1020
        %1062 = vmatpush.msra.mxu0 %v1019
        %1063 = vmatpush.msra.mxu0 %v1018
        %1064 = vmatpush.msra.mxu0 %v1017
        %1065 = vmatpush.msra.mxu0 %v1016
        %1066 = vmatpush.msra.mxu0 %v1015
        %1067 = vmatpush.msra.mxu0 %v1014
        %1068 = vmatpush.msra.mxu0 %v1013
        %1069 = vmatpush.msra.mxu0 %v1012
        %1070 = vmatpush.msra.mxu0 %v1011
        %1071 = vmatpush.msra.mxu0 %v1010
        %1072 = vmatmul.f32.gmra.mxu0 %v1055
        %v1073 = vpop.f32.mrf.mxu0
        %v1074 = vadd.f32 0.0, %v1073
        %1075 = vdwg.mxu0
        %v1076 = vmul.f32 %v1074, 0.015625
        %v1077 = vadd.f32 %v1076, 1e-05
        %v1078 = vrsqrt.pop %v1077
        %v1079 = vmul.f32 %v1078, %v1077
        %v1080 = vmul.f32 %v1079, %v1078
        %v1081 = vmul.f32 0.5, %v1080
        %v1082 = vsub.f32 1.5, %v1081
        %v1083 = vmul.f32 %v1078, %v1082
        %vm1084 = vweird.f32 %v1077
        %vm1085 = vweird.f32 %v1078
        %vm1086 = vmor %vm1084, %vm1085
        %v1087 = vsel %vm1086, %v1078, %v1083
        %v1088 = vperm.slane %v1087, 0
        %v1089 = vmul.f32 %v1048, %v1088
        %vm1090 = vcmp.ge.f32.partialorder %v1089, 0.0
        %v1091 = vmul.f32 %v1089, 0.2
        %v1092 = vsel %vm1090, %v1089, %v1091
        %v1094 = vrot.slane %v1092, 7
        %v1096 = vsel %vm882, 0.0, %v1094
        %v1097 = vrot.slane %v1092, 1
        %v1099 = vsel %vm886, %v1097, 0.0
        %v1100 = vld [vmem:[#allocation10] sm:$0xff]
        %v1101 = vld [vmem:[#allocation10 + $0x8] sm:$0xff]
        %v1102 = vld [vmem:[#allocation10 + $0x10] sm:$0xff]
        %v1103 = vld [vmem:[#allocation10 + $0x18] sm:$0xff]
        %v1104 = vld [vmem:[#allocation10 + $0x20] sm:$0xff]
        %v1105 = vld [vmem:[#allocation10 + $0x28] sm:$0xff]
        %v1106 = vld [vmem:[#allocation10 + $0x30] sm:$0xff]
        %v1107 = vld [vmem:[#allocation10 + $0x38] sm:$0xff]
        %v1108 = vld [vmem:[#allocation10 + $0x40] sm:$0xff]
        %v1109 = vld [vmem:[#allocation10 + $0x48] sm:$0xff]
        %v1110 = vld [vmem:[#allocation10 + $0x50] sm:$0xff]
        %v1111 = vld [vmem:[#allocation10 + $0x58] sm:$0xff]
        %v1112 = vld [vmem:[#allocation10 + $0x60] sm:$0xff]
        %v1113 = vld [vmem:[#allocation10 + $0x68] sm:$0xff]
        %v1114 = vld [vmem:[#allocation10 + $0x70] sm:$0xff]
        %v1115 = vld [vmem:[#allocation10 + $0x78] sm:$0xff]
        %s1116 = scalar_lea.vmem [#allocation10], 128
        %v1117 = vld [vmem:[%s1116] sm:$0xff]
        %v1118 = vld [vmem:[%s1116 + $0x8] sm:$0xff]
        %v1119 = vld [vmem:[%s1116 + $0x10] sm:$0xff]
        %v1120 = vld [vmem:[%s1116 + $0x18] sm:$0xff]
        %v1121 = vld [vmem:[%s1116 + $0x20] sm:$0xff]
        %v1122 = vld [vmem:[%s1116 + $0x28] sm:$0xff]
        %v1123 = vld [vmem:[%s1116 + $0x30] sm:$0xff]
        %v1124 = vld [vmem:[%s1116 + $0x38] sm:$0xff]
        %v1125 = vld [vmem:[%s1116 + $0x40] sm:$0xff]
        %v1126 = vld [vmem:[%s1116 + $0x48] sm:$0xff]
        %v1127 = vld [vmem:[%s1116 + $0x50] sm:$0xff]
        %v1128 = vld [vmem:[%s1116 + $0x58] sm:$0xff]
        %v1129 = vld [vmem:[%s1116 + $0x60] sm:$0xff]
        %v1130 = vld [vmem:[%s1116 + $0x68] sm:$0xff]
        %v1131 = vld [vmem:[%s1116 + $0x70] sm:$0xff]
        %v1132 = vld [vmem:[%s1116 + $0x78] sm:$0xff]
        %1133 = vmatpush.msra.mxu0 %v1132
        %1134 = vmatpush.msra.mxu0 %v1131
        %1135 = vmatpush.msra.mxu0 %v1130
        %1136 = vmatpush.msra.mxu0 %v1129
        %1137 = vmatpush.msra.mxu0 %v1128
        %1138 = vmatpush.msra.mxu0 %v1127
        %1139 = vmatpush.msra.mxu0 %v1126
        %1140 = vmatpush.msra.mxu0 %v1125
        %1141 = vmatpush.msra.mxu0 %v1124
        %1142 = vmatpush.msra.mxu0 %v1123
        %1143 = vmatpush.msra.mxu0 %v1122
        %1144 = vmatpush.msra.mxu0 %v1121
        %1145 = vmatpush.msra.mxu0 %v1120
        %1146 = vmatpush.msra.mxu0 %v1119
        %1147 = vmatpush.msra.mxu0 %v1118
        %1148 = vmatpush.msra.mxu0 %v1117
        %1149 = vmatmul.f32.gmra.mxu0 %v1092
        %v1150 = vpop.f32.mrf.mxu0
        %v1151 = vadd.f32 0.0, %v1150
        %1152 = vdwg.mxu0
        %1153 = vmatpush.msra.mxu0 %v1115
        %1154 = vmatpush.msra.mxu0 %v1114
        %1155 = vmatpush.msra.mxu0 %v1113
        %1156 = vmatpush.msra.mxu0 %v1112
        %1157 = vmatpush.msra.mxu0 %v1111
        %1158 = vmatpush.msra.mxu0 %v1110
        %1159 = vmatpush.msra.mxu0 %v1109
        %1160 = vmatpush.msra.mxu0 %v1108
        %1161 = vmatpush.msra.mxu0 %v1107
        %1162 = vmatpush.msra.mxu0 %v1106
        %1163 = vmatpush.msra.mxu0 %v1105
        %1164 = vmatpush.msra.mxu0 %v1104
        %1165 = vmatpush.msra.mxu0 %v1103
        %1166 = vmatpush.msra.mxu0 %v1102
        %1167 = vmatpush.msra.mxu0 %v1101
        %1168 = vmatpush.msra.mxu0 %v1100
        %1169 = vmatmul.f32.gmra.mxu0 %v1096
        %v1170 = vpop.f32.mrf.mxu0
        %v1171 = vadd.f32 %v1151, %v1170
        %1172 = vdwg.mxu0
        %s1173 = scalar_lea.vmem [#allocation10], 256
        %v1174 = vld [vmem:[%s1173] sm:$0xff]
        %v1175 = vld [vmem:[%s1173 + $0x8] sm:$0xff]
        %v1176 = vld [vmem:[%s1173 + $0x10] sm:$0xff]
        %v1177 = vld [vmem:[%s1173 + $0x18] sm:$0xff]
        %v1178 = vld [vmem:[%s1173 + $0x20] sm:$0xff]
        %v1179 = vld [vmem:[%s1173 + $0x28] sm:$0xff]
        %v1180 = vld [vmem:[%s1173 + $0x30] sm:$0xff]
        %v1181 = vld [vmem:[%s1173 + $0x38] sm:$0xff]
        %v1182 = vld [vmem:[%s1173 + $0x40] sm:$0xff]
        %v1183 = vld [vmem:[%s1173 + $0x48] sm:$0xff]
        %v1184 = vld [vmem:[%s1173 + $0x50] sm:$0xff]
        %v1185 = vld [vmem:[%s1173 + $0x58] sm:$0xff]
        %v1186 = vld [vmem:[%s1173 + $0x60] sm:$0xff]
        %v1187 = vld [vmem:[%s1173 + $0x68] sm:$0xff]
        %v1188 = vld [vmem:[%s1173 + $0x70] sm:$0xff]
        %v1189 = vld [vmem:[%s1173 + $0x78] sm:$0xff]
        %1190 = vmatpush.msra.mxu0 %v1189
        %1191 = vmatpush.msra.mxu0 %v1188
        %1192 = vmatpush.msra.mxu0 %v1187
        %1193 = vmatpush.msra.mxu0 %v1186
        %1194 = vmatpush.msra.mxu0 %v1185
        %1195 = vmatpush.msra.mxu0 %v1184
        %1196 = vmatpush.msra.mxu0 %v1183
        %1197 = vmatpush.msra.mxu0 %v1182
        %1198 = vmatpush.msra.mxu0 %v1181
        %1199 = vmatpush.msra.mxu0 %v1180
        %1200 = vmatpush.msra.mxu0 %v1179
        %1201 = vmatpush.msra.mxu0 %v1178
        %1202 = vmatpush.msra.mxu0 %v1177
        %1203 = vmatpush.msra.mxu0 %v1176
        %1204 = vmatpush.msra.mxu0 %v1175
        %1205 = vmatpush.msra.mxu0 %v1174
        %1206 = vmatmul.f32.gmra.mxu0 %v1099
        %v1207 = vpop.f32.mrf.mxu0
        %v1208 = vadd.f32 0.0, %v1207
        %1209 = vdwg.mxu0
        %v1210 = vadd.f32 %v1171, %v1208
        %v1211 = vld [vmem:[%s7] sm:$0x1]
        %v1213 = vperm.slane %v1211, 0
        %v1215 = vadd.f32 %v1210, %v1213
        %v1216 = vrot.slane %v1215, 4
        %v1217 = vadd.f32 %v1215, %v1216
        %v1218 = vrot.slane %v1217, 2
        %v1219 = vadd.f32 %v1217, %v1218
        %v1220 = vrot.slane %v1219, 1
        %v1221 = vadd.f32 %v1219, %v1220
        %1222 = vmatpush.msra.mxu0 %v1025
        %1223 = vmatpush.msra.mxu0 %v1024
        %1224 = vmatpush.msra.mxu0 %v1023
        %1225 = vmatpush.msra.mxu0 %v1022
        %1226 = vmatpush.msra.mxu0 %v1021
        %1227 = vmatpush.msra.mxu0 %v1020
        %1228 = vmatpush.msra.mxu0 %v1019
        %1229 = vmatpush.msra.mxu0 %v1018
        %1230 = vmatpush.msra.mxu0 %v1017
        %1231 = vmatpush.msra.mxu0 %v1016
        %1232 = vmatpush.msra.mxu0 %v1015
        %1233 = vmatpush.msra.mxu0 %v1014
        %1234 = vmatpush.msra.mxu0 %v1013
        %1235 = vmatpush.msra.mxu0 %v1012
        %1236 = vmatpush.msra.mxu0 %v1011
        %1237 = vmatpush.msra.mxu0 %v1010
        %1238 = vmatmul.f32.gmra.mxu0 %v1221
        %v1239 = vpop.f32.mrf.mxu0
        %v1240 = vadd.f32 0.0, %v1239
        %1241 = vdwg.mxu0
        %v1242 = vmul.f32 %v1240, 0.015625
        %v1243 = vperm.slane %v1242, 0
        %v1244 = vsub.f32 %v1215, %v1243
        %v1245 = vmul.f32 %v1244, %v1244
        %v1246 = vrot.slane %v1245, 4
        %v1247 = vadd.f32 %v1245, %v1246
        %v1248 = vrot.slane %v1247, 2
        %v1249 = vadd.f32 %v1247, %v1248
        %v1250 = vrot.slane %v1249, 1
        %v1251 = vadd.f32 %v1249, %v1250
        %1252 = vmatpush.msra.mxu0 %v1025
        %1253 = vmatpush.msra.mxu0 %v1024
        %1254 = vmatpush.msra.mxu0 %v1023
        %1255 = vmatpush.msra.mxu0 %v1022
        %1256 = vmatpush.msra.mxu0 %v1021
        %1257 = vmatpush.msra.mxu0 %v1020
        %1258 = vmatpush.msra.mxu0 %v1019
        %1259 = vmatpush.msra.mxu0 %v1018
        %1260 = vmatpush.msra.mxu0 %v1017
        %1261 = vmatpush.msra.mxu0 %v1016
        %1262 = vmatpush.msra.mxu0 %v1015
        %1263 = vmatpush.msra.mxu0 %v1014
        %1264 = vmatpush.msra.mxu0 %v1013
        %1265 = vmatpush.msra.mxu0 %v1012
        %1266 = vmatpush.msra.mxu0 %v1011
        %1267 = vmatpush.msra.mxu0 %v1010
        %1268 = vmatmul.f32.gmra.mxu0 %v1251
        %v1269 = vpop.f32.mrf.mxu0
        %v1270 = vadd.f32 0.0, %v1269
        %1271 = vdwg.mxu0
        %v1272 = vmul.f32 %v1270, 0.015625
        %v1273 = vadd.f32 %v1272, 1e-05
        %v1274 = vrsqrt.pop %v1273
        %v1275 = vmul.f32 %v1274, %v1273
        %v1276 = vmul.f32 %v1275, %v1274
        %v1277 = vmul.f32 0.5, %v1276
        %v1278 = vsub.f32 1.5, %v1277
        %v1279 = vmul.f32 %v1274, %v1278
        %vm1280 = vweird.f32 %v1273
        %vm1281 = vweird.f32 %v1274
        %vm1282 = vmor %vm1280, %vm1281
        %v1283 = vsel %vm1282, %v1274, %v1279
        %v1284 = vperm.slane %v1283, 0
        %v1285 = vmul.f32 %v1244, %v1284
        %vm1286 = vcmp.ge.f32.partialorder %v1285, 0.0
        %v1287 = vmul.f32 %v1285, 0.2
        %v1288 = vsel %vm1286, %v1285, %v1287
        %1289 = vst [vmem:[%s391] sm:$0xff] %v1288
        %s1290 = sand.u32 %s208, 1
        %s1291 = scalar_lea.sflag [#allocation4], %s1290
        %s1292 = sand.u32 %s208, 1
        %s1293 = smul.addr %s1292, 8
        %s1294 = scalar_lea.vmem [#allocation11], %s1293
        // Predicated region
        $region73: #{tpu_custom_call.1} parent=51 // pred_check
          %p1295 = pneg %p218
        $region74: #{tpu_custom_call.1} parent=51 // pred_check_branch
          %1297 = sbr.rel (%p1295) target = $region76
        $region75: #{tpu_custom_call.1} parent=51 // pred_region
          %1299 = vsyncadd %s1291, 0
          %s1300 = smul.addr %s27, 8
          %s1301 = scalar_lea.hbm %s8, %s1300
          %s1303 = sshll.u32 %s1294, 4
          %s1304 = int_to_ptr.vmem [resolvable:$true] %s1303
          %s1305 = sshll.u32 %s1301, 4
          %s1306 = int_to_ptr.hbm [resolvable:$true] %s1305
          %1308 = dma.vmem_to_hbm [thread:$0]  %s1304, 128, %s1306, %s1291
        $region76: #{tpu_custom_call.1} parent=51 // pred_fallthru
          _
      $region52: #{tpu_custom_call.1} parent=5 // pred_fallthru
        _
      %p1309 = scmp.le.s32.totalorder 2, %s22
      // Predicated region
      $region77: #{tpu_custom_call.1} parent=5 // pred_check
        %p1310 = pneg %p1309
      $region78: #{tpu_custom_call.1} parent=5 // pred_check_branch
        %1312 = sbr.rel (%p1310) target = $region80
      $region79: #{tpu_custom_call.1} parent=5 // pred_region
        %s1313 = ssub.s32 %s22, 2
        // Predicated region
        $region81: #{tpu_custom_call.1} parent=79 // pred_check
          %p1314 = pneg %p224
        $region82: #{tpu_custom_call.1} parent=79 // pred_check_branch
          %1316 = sbr.rel (%p1314) target = $region84
        $region83: #{tpu_custom_call.1} parent=79 // pred_region
          %s1317 = sand.u32 %s209, 1
          %s1318 = scalar_lea.sflag [#allocation4], %s1317
          %s1319 = sand.u32 %s209, 1
          %s1320 = smul.addr %s1319, 8
          %s1321 = scalar_lea.vmem [#allocation11], %s1320
          %1323 = dma.done %s1318, 128
        $region84: #{tpu_custom_call.1} parent=79 // pred_fallthru
          _
      $region80: #{tpu_custom_call.1} parent=5 // pred_fallthru
        _
    $region6: #{tpu_custom_call.1} parent=1 // loop_footer
      %s26 = sadd.s32 1, %s22
    $region7: #{tpu_custom_call.1} parent=1 // loop_footer_branch
      %21 = sbr.rel target = $region3
    $region8: #{tpu_custom_call.1} parent=1 // loop_exit
      _
    %1324 = vsyncpa [#allocation3], 1
    %s1325 = scalar_lea.sflag [#allocation3], 1
    %1326 = vsyncpa %s1325, 1
    %1327 = vsyncpa [#allocation6], 1
    %1328 = vsyncpa [#allocation9], 1
    %1329 = vsyncpa [#allocation4], 1
    %s1330 = scalar_lea.sflag [#allocation4], 1
    %1331 = vsyncpa %s1330, 1

</llo_original>
